<compile_context>
chip_gen: v7x
topology: tpu7x:2x2x1
jax: 0.10.0
libtpu: 0.0.40
codegen_flags: <defaults>
</compile_context>

<pallas_src>
import functools

import jax
import jax.numpy as jnp
import numpy as np
from jax.experimental import pallas as pl
from jax.experimental.pallas import tpu as pltpu


def thinconv_kernel(x_ref, top_ref, bot_ref, w1_ref, b1_ref, w2_ref, b2_ref,
                    o_ref, y_sc, *, W, tile_h):
    """One (batch-pack, H-tile) step, spatial dims flattened onto the lane axis.

    x_ref   : (Cin_p,  L)      f32  input tile, L = tile_h * W (multiple of 128)
    top_ref : (Cin_p,  W)      f32  row tile_h*t - 1 (zeros at the image top)
    bot_ref : (Cin_p,  W)      f32  row tile_h*(t+1)  (zeros at the image bottom)
    w1_ref  : (3, Cout_p, Cin_p) f32  conv1 weights, BN1 scale folded, block-diag
    b1_ref  : (Cout_p, 1)      f32  folded BN1 shift
    w2_ref  : (3, Cout_p, Cout_p) f32 conv2 weights, BN2 scale folded, block-diag
    b2_ref  : (Cout_p, 1)      f32  folded BN2 shift
    o_ref   : (Cout_p, L)      f32  output tile (lane-dense store)
    y_sc    : (Cout_p, L)      f32  VMEM scratch for the conv1 accumulator
    """
    L = tile_h * W
    x = x_ref[...]
    flat = jax.lax.broadcasted_iota(jnp.int32, (1, L), 1)

    # ---- Conv2d (3,1), padding (1,0): taps along H = lane shifts by +-W -----
    # Interior rows come from an XLU roll of this tile; the single cross-tile
    # boundary row of each tap is zero-masked here and patched from the 1-row
    # halos below (the halos are zero at the true image border).
    x_up = jnp.where(flat < W, 0.0, pltpu.roll(x, shift=W, axis=1))        # x[h-1]
    x_dn = jnp.where(flat >= L - W, 0.0, pltpu.roll(x, shift=L - W, axis=1))  # x[h+1]

    y_sc[...] = (jnp.dot(w1_ref[0], x_up, preferred_element_type=jnp.float32)
                 + jnp.dot(w1_ref[1], x, preferred_element_type=jnp.float32)
                 + jnp.dot(w1_ref[2], x_dn, preferred_element_type=jnp.float32))
    # Halo contributions only touch the first / last row of the tile: two tiny
    # (Cout_p, W) matmuls accumulated into lane sub-ranges of the scratch.
    y_sc[:, 0:W] = y_sc[:, 0:W] + jnp.dot(
        w1_ref[0], top_ref[...], preferred_element_type=jnp.float32)
    y_sc[:, L - W:L] = y_sc[:, L - W:L] + jnp.dot(
        w1_ref[2], bot_ref[...], preferred_element_type=jnp.float32)

    y = jnp.maximum(y_sc[...] + b1_ref[...], 0.0)   # folded BN1 shift + ReLU

    # ---- Conv2d (1,3), padding (0,1): taps along W = lane shifts by +-1 -----
    colw = flat % W                                  # in-kernel column index
    y_l = jnp.where(colw == 0, 0.0, pltpu.roll(y, shift=1, axis=1))        # y[w-1]
    y_r = jnp.where(colw == W - 1, 0.0, pltpu.roll(y, shift=L - 1, axis=1))  # y[w+1]

    # Three accumulating MXU matmuls -- no (3*Cout, L) concat buffer.
    z = (jnp.dot(w2_ref[0], y_l, preferred_element_type=jnp.float32)
         + jnp.dot(w2_ref[1], y, preferred_element_type=jnp.float32)
         + jnp.dot(w2_ref[2], y_r, preferred_element_type=jnp.float32))
    # TODO(synk): optionally store bf16 here (halves HBM writeback on v6e/v7x);
    # kept f32 to hold the 1e-4 tolerance.
    o_ref[...] = jnp.maximum(z + b2_ref[...], 0.0).astype(o_ref.dtype)


def _vmem_limit_bytes():
    """Per-generation scoped-VMEM limit (v7x ~48 MiB, v6e/v5e ~96 MiB)."""
    try:
        cap = int(pltpu.get_tpu_info().vmem_capacity_bytes)
    except Exception:
        cap = 64 * 1024 * 1024
    return min(cap * 3 // 4, 96 * 1024 * 1024)


def _choose_tile_h(H, W, c_in_p, c_out_p, budget_bytes):
    """Largest H tile with (tile_h*W) % 128 == 0 whose working set fits budget."""
    # Rough per-lane f32 working set: x / x_up / x_dn (+ pipelined input) and
    # y / y_l / y_r / z (+ pipelined output) + scratch.
    per_lane_bytes = 4 * (5 * c_in_p + 6 * c_out_p)
    aligned = [th for th in range(1, H + 1)
               if H % th == 0 and (th * W) % 128 == 0]
    if not aligned:
        return H  # whole image: block lane extent == full array dim is legal
    fitting = [th for th in aligned
               if th * W * per_lane_bytes <= budget_bytes]
    return max(fitting) if fitting else min(aligned)


@functools.partial(jax.jit, static_argnames=("tile_h",))
def thinconv_pallas(x_nchw, w1, scale1, shift1, w2, scale2, shift2, *,
                    tile_h=None):
    """x_nchw: (N, Cin, H, W) f32 -> (N, Cout, H, W) f32 (ThinConv, inference BN)."""
    N, Cin, H, W = x_nchw.shape
    Cout = w1.shape[-1]

    # Pack two batch images per grid step when possible so the Cin=4 input rows
    # fill all 8 f32 sublanes of each (8,128) vreg / VMEM tile.
    P = 2 if N % 2 == 0 else 1
    NB = N // P
    cin_p, cout_p = P * Cin, P * Cout

    vmem_limit = _vmem_limit_bytes()
    if tile_h is None:
        tile_h = _choose_tile_h(H, W, cin_p, cout_p, vmem_limit // 2)
    if H % tile_h != 0:
        raise ValueError(f"tile_h={tile_h} must divide H={H}")
    if tile_h != H and (tile_h * W) % 128 != 0:
        raise ValueError("tile_h*W must be a multiple of 128 (or tile_h == H)")
    T = H // tile_h
    L = tile_h * W

    # Free reshapes of contiguous NCHW: merge P adjacent images onto the
    # channel axis, flatten spatial dims onto the lane axis.
    x5 = x_nchw.reshape(NB, cin_p, H, W)
    x_flat = x5.reshape(NB, cin_p, H * W)

    # One-row halos per H tile, (NB, T, Cin_p, W), zeros at the image borders.
    # These are tiny (2/tile_h of the input) and built once here.
    top = jnp.transpose(x5[:, :, tile_h - 1:H - 1:tile_h, :], (0, 2, 1, 3))
    top = jnp.pad(top, ((0, 0), (1, 0), (0, 0), (0, 0)))
    bot = jnp.transpose(x5[:, :, tile_h:H:tile_h, :], (0, 2, 1, 3))
    bot = jnp.pad(bot, ((0, 0), (0, 1), (0, 0), (0, 0)))

    # Fold BN scales into the conv weights (exact for inference-mode BN) and
    # replicate block-diagonally so the P packed images stay independent.
    w1_t = jnp.transpose(w1, (0, 2, 1)) * scale1[None, :, None]   # (3, Cout, Cin)
    w2_t = jnp.transpose(w2, (0, 2, 1)) * scale2[None, :, None]   # (3, Cout, Cout)
    eye_p = jnp.eye(P, dtype=w1_t.dtype)
    w1_bd = jnp.einsum("pq,kdc->kpdqc", eye_p, w1_t).reshape(3, cout_p, cin_p)
    w2_bd = jnp.einsum("pq,kde->kpdqe", eye_p, w2_t).reshape(3, cout_p, cout_p)
    b1 = jnp.tile(shift1, (P,)).reshape(cout_p, 1)
    b2 = jnp.tile(shift2, (P,)).reshape(cout_p, 1)

    kernel = functools.partial(thinconv_kernel, W=W, tile_h=tile_h)

    # TODO(synk): if xprof shows the input DMA exposed between grid steps, add
    # pipeline_mode=pl.Buffered(3) on the x BlockSpec (budget it on v7x).
    out_flat = pl.pallas_call(
        kernel,
        out_shape=jax.ShapeDtypeStruct((NB, cout_p, H * W), jnp.float32),
        grid_spec=pltpu.PrefetchScalarGridSpec(
            num_scalar_prefetch=0,
            grid=(NB, T),
            in_specs=[
                pl.BlockSpec((pl.Squeezed(), cin_p, L), lambda n, t: (n, 0, t)),
                pl.BlockSpec((pl.Squeezed(), pl.Squeezed(), cin_p, W),
                             lambda n, t: (n, t, 0, 0)),
                pl.BlockSpec((pl.Squeezed(), pl.Squeezed(), cin_p, W),
                             lambda n, t: (n, t, 0, 0)),
                pl.BlockSpec((3, cout_p, cin_p), lambda n, t: (0, 0, 0)),
                pl.BlockSpec((cout_p, 1), lambda n, t: (0, 0)),
                pl.BlockSpec((3, cout_p, cout_p), lambda n, t: (0, 0, 0)),
                pl.BlockSpec((cout_p, 1), lambda n, t: (0, 0)),
            ],
            out_specs=pl.BlockSpec((pl.Squeezed(), cout_p, L),
                                   lambda n, t: (n, 0, t)),
            scratch_shapes=[pltpu.VMEM((cout_p, L), jnp.float32)],
        ),
        compiler_params=pltpu.CompilerParams(
            dimension_semantics=("parallel", "parallel"),
            vmem_limit_bytes=vmem_limit,
        ),
    )(x_flat, top, bot, w1_bd, b1, w2_bd, b2)

    # Packed channel index p*Cout + d linearizes exactly like (N, Cout): free.
    return out_flat.reshape(N, Cout, H, W)


def thinconv_ref(x_nchw, w1, scale1, shift1, w2, scale2, shift2):
    """Pure-JAX reference (same math, no Pallas) for correctness checking."""
    N, Cin, H, W = x_nchw.shape
    x = jnp.transpose(x_nchw, (0, 2, 3, 1))  # NHWC

    xp = jnp.pad(x, ((0, 0), (1, 1), (0, 0), (0, 0)))
    y = sum(jnp.einsum('nhwc,cd->nhwd', xp[:, k:k + H], w1[k]) for k in range(3))
    y = jnp.maximum(y * scale1 + shift1, 0.0)

    yp = jnp.pad(y, ((0, 0), (0, 0), (1, 1), (0, 0)))
    z = sum(jnp.einsum('nhwc,cd->nhwd', yp[:, :, k:k + W], w2[k]) for k in range(3))
    z = jnp.maximum(z * scale2 + shift2, 0.0)

    return jnp.transpose(z, (0, 3, 1, 2))  # NCHW


if __name__ == "__main__":
    # Small shapes consistent with the module.
    N, Cin, Cout, H, W = 2, 4, 8, 16, 16
    eps = 1e-5

    key = jax.random.PRNGKey(0)
    kx, kw1, kw2 = jax.random.split(key, 3)

    x = jax.random.normal(kx, (N, Cin, H, W), dtype=jnp.float32)

    # Conv weights: PyTorch shapes are (Cout, Cin, 3, 1) and (Cout, Cout, 1, 3);
    # stored here as (kh/kw, Cin, Cout).
    w1 = jax.random.normal(kw1, (3, Cin, Cout), dtype=jnp.float32) * 0.2
    w2 = jax.random.normal(kw2, (3, Cout, Cout), dtype=jnp.float32) * 0.2

    # Deterministic (non-trivial) BatchNorm parameters, inference mode.
    gamma1 = 1.0 + 0.1 * jnp.arange(Cout, dtype=jnp.float32)
    beta1 = 0.05 * jnp.arange(Cout, dtype=jnp.float32)
    mean1 = 0.01 * jnp.arange(Cout, dtype=jnp.float32)
    var1 = 1.0 + 0.02 * jnp.arange(Cout, dtype=jnp.float32)
    scale1 = gamma1 / jnp.sqrt(var1 + eps)
    shift1 = beta1 - mean1 * scale1

    gamma2 = 1.0 - 0.05 * jnp.arange(Cout, dtype=jnp.float32)
    beta2 = -0.03 * jnp.arange(Cout, dtype=jnp.float32)
    mean2 = 0.02 * jnp.arange(Cout, dtype=jnp.float32)
    var2 = 1.0 + 0.01 * jnp.arange(Cout, dtype=jnp.float32)
    scale2 = gamma2 / jnp.sqrt(var2 + eps)
    shift2 = beta2 - mean2 * scale2

    ref = thinconv_ref(x, w1, scale1, shift1, w2, scale2, shift2)

    # 1) Explicit H-tiling (T=2): exercises the one-row halo path and the
    #    2-image batch packing (P=2).
    out_tiled = jax.block_until_ready(
        thinconv_pallas(x, w1, scale1, shift1, w2, scale2, shift2, tile_h=8))
    np.testing.assert_allclose(np.asarray(out_tiled), np.asarray(ref),
                               rtol=1e-4, atol=1e-4)

    # 2) Auto tile selection (whole image at this size, T=1).
    out_auto = jax.block_until_ready(
        thinconv_pallas(x, w1, scale1, shift1, w2, scale2, shift2))
    np.testing.assert_allclose(np.asarray(out_auto), np.asarray(ref),
                               rtol=1e-4, atol=1e-4)

    # 3) Odd batch (P=1, unpacked path).
    out_odd = jax.block_until_ready(
        thinconv_pallas(x[:1], w1, scale1, shift1, w2, scale2, shift2, tile_h=8))
    np.testing.assert_allclose(np.asarray(out_odd), np.asarray(ref[:1]),
                               rtol=1e-4, atol=1e-4)

    print("KERNEL_OK")
</pallas_src>

<mosaic_0001>
module attributes {stable_mosaic.version = 11 : i64} {
  func.func @thinconv_kernel(%arg0: i32, %arg1: i32, %arg2: memref<1x8x128xf32, #tpu.memory_space<vmem>>, %arg3: memref<1x1x8x16xf32, #tpu.memory_space<vmem>>, %arg4: memref<1x1x8x16xf32, #tpu.memory_space<vmem>>, %arg5: memref<3x16x8xf32, #tpu.memory_space<vmem>>, %arg6: memref<16x1xf32, #tpu.memory_space<vmem>>, %arg7: memref<3x16x16xf32, #tpu.memory_space<vmem>>, %arg8: memref<16x1xf32, #tpu.memory_space<vmem>>, %arg9: memref<1x16x128xf32, #tpu.memory_space<vmem>>, %arg10: memref<16x128xf32, #tpu.memory_space<vmem>>) attributes {dimension_semantics = [#tpu.dimension_semantics<parallel>, #tpu.dimension_semantics<parallel>], iteration_bounds = array<i64: 1, 2>, scalar_prefetch = 0 : i64, scratch_operands = 1 : i64, tpu.core_type = #tpu.core_type<tc>, window_params = [{transform_indices = @transform_0, window_bounds = array<i64: 1, 8, 128>}, {transform_indices = @transform_1, window_bounds = array<i64: 1, 1, 8, 16>}, {transform_indices = @transform_2, window_bounds = array<i64: 1, 1, 8, 16>}, {pipeline_mode = #tpu.pipeline_mode<synchronous>, transform_indices = @transform_3, window_bounds = array<i64: 3, 16, 8>}, {pipeline_mode = #tpu.pipeline_mode<synchronous>, transform_indices = @transform_4, window_bounds = array<i64: 16, 1>}, {pipeline_mode = #tpu.pipeline_mode<synchronous>, transform_indices = @transform_5, window_bounds = array<i64: 3, 16, 16>}, {pipeline_mode = #tpu.pipeline_mode<synchronous>, transform_indices = @transform_6, window_bounds = array<i64: 16, 1>}, {transform_indices = @transform_7, window_bounds = array<i64: 1, 16, 128>}]} {
    %c0 = arith.constant 0 : index
    %c0_0 = arith.constant 0 : index
    %c0_1 = arith.constant 0 : index
    %0 = vector.load %arg2[%c0, %c0_0, %c0_1] : memref<1x8x128xf32, #tpu.memory_space<vmem>>, vector<1x8x128xf32>
    %1 = vector.shape_cast %0 : vector<1x8x128xf32> to vector<8x128xf32>
    %2 = tpu.iota {dimensions = array<i32: 1>} : vector<1x128xi32>
    %c16_i32 = arith.constant 16 : i32
    %3 = vector.broadcast %c16_i32 : i32 to vector<1x128xi32>
    %4 = arith.cmpi slt, %2, %3 : vector<1x128xi32>
    %c16_i32_2 = arith.constant 16 : i32
    %5 = tpu.dynamic_rotate %1 by %c16_i32_2 dim 1 : vector<8x128xf32>, i32 -> vector<8x128xf32>
    %cst = arith.constant 0.000000e+00 : f32
    %6 = vector.shape_cast %4 : vector<1x128xi1> to vector<1x128xi1>
    %7 = vector.broadcast %6 : vector<1x128xi1> to vector<8x128xi1>
    %8 = vector.broadcast %cst : f32 to vector<8x128xf32>
    %9 = arith.select %7, %8, %5 : vector<8x128xi1>, vector<8x128xf32>
    %c112_i32 = arith.constant 112 : i32
    %10 = vector.broadcast %c112_i32 : i32 to vector<1x128xi32>
    %11 = arith.cmpi sge, %2, %10 : vector<1x128xi32>
    %c112_i32_3 = arith.constant 112 : i32
    %12 = tpu.dynamic_rotate %1 by %c112_i32_3 dim 1 : vector<8x128xf32>, i32 -> vector<8x128xf32>
    %cst_4 = arith.constant 0.000000e+00 : f32
    %13 = vector.shape_cast %11 : vector<1x128xi1> to vector<1x128xi1>
    %14 = vector.broadcast %13 : vector<1x128xi1> to vector<8x128xi1>
    %15 = vector.broadcast %cst_4 : f32 to vector<8x128xf32>
    %16 = arith.select %14, %15, %12 : vector<8x128xi1>, vector<8x128xf32>
    %c0_5 = arith.constant 0 : index
    %c0_6 = arith.constant 0 : index
    %c0_7 = arith.constant 0 : index
    %17 = vector.load %arg5[%c0_5, %c0_6, %c0_7] : memref<3x16x8xf32, #tpu.memory_space<vmem>>, vector<1x16x8xf32>
    %18 = vector.shape_cast %17 : vector<1x16x8xf32> to vector<16x8xf32>
    %cst_8 = arith.constant dense<0.000000e+00> : vector<16x128xf32>
    %19 = tpu.matmul %18, %9, %cst_8 {dimension_numbers = #tpu.dot_dimension_numbers<[1], [0], [0], [1], [0, 0, 1, 1], [], []>} : vector<16x8xf32>, vector<8x128xf32>, vector<16x128xf32> -> vector<16x128xf32>
    %c1 = arith.constant 1 : index
    %c0_9 = arith.constant 0 : index
    %c0_10 = arith.constant 0 : index
    %20 = vector.load %arg5[%c1, %c0_9, %c0_10] : memref<3x16x8xf32, #tpu.memory_space<vmem>>, vector<1x16x8xf32>
    %21 = vector.shape_cast %20 : vector<1x16x8xf32> to vector<16x8xf32>
    %cst_11 = arith.constant dense<0.000000e+00> : vector<16x128xf32>
    %22 = tpu.matmul %21, %1, %cst_11 {dimension_numbers = #tpu.dot_dimension_numbers<[1], [0], [0], [1], [0, 0, 1, 1], [], []>} : vector<16x8xf32>, vector<8x128xf32>, vector<16x128xf32> -> vector<16x128xf32>
    %23 = arith.addf %19, %22 : vector<16x128xf32>
    %c2 = arith.constant 2 : index
    %c0_12 = arith.constant 0 : index
    %c0_13 = arith.constant 0 : index
    %24 = vector.load %arg5[%c2, %c0_12, %c0_13] : memref<3x16x8xf32, #tpu.memory_space<vmem>>, vector<1x16x8xf32>
    %25 = vector.shape_cast %24 : vector<1x16x8xf32> to vector<16x8xf32>
    %cst_14 = arith.constant dense<0.000000e+00> : vector<16x128xf32>
    %26 = tpu.matmul %25, %16, %cst_14 {dimension_numbers = #tpu.dot_dimension_numbers<[1], [0], [0], [1], [0, 0, 1, 1], [], []>} : vector<16x8xf32>, vector<8x128xf32>, vector<16x128xf32> -> vector<16x128xf32>
    %27 = arith.addf %23, %26 : vector<16x128xf32>
    %c0_15 = arith.constant 0 : index
    %c0_16 = arith.constant 0 : index
    %28 = vector.load %arg10[%c0_15, %c0_16] : memref<16x128xf32, #tpu.memory_space<vmem>>, vector<16x128xf32>
    tpu.vector_store %arg10[%c0_15, %c0_16], %27 {strides = array<i32>} : memref<16x128xf32, #tpu.memory_space<vmem>>, vector<16x128xf32>,
    %c0_17 = arith.constant 0 : index
    %c0_18 = arith.constant 0 : index
    %29 = vector.load %arg10[%c0_17, %c0_18] : memref<16x128xf32, #tpu.memory_space<vmem>>, vector<16x16xf32>
    %c0_19 = arith.constant 0 : index
    %c0_20 = arith.constant 0 : index
    %c0_21 = arith.constant 0 : index
    %30 = vector.load %arg5[%c0_19, %c0_20, %c0_21] : memref<3x16x8xf32, #tpu.memory_space<vmem>>, vector<1x16x8xf32>
    %31 = vector.shape_cast %30 : vector<1x16x8xf32> to vector<16x8xf32>
    %c0_22 = arith.constant 0 : index
    %c0_23 = arith.constant 0 : index
    %c0_24 = arith.constant 0 : index
    %c0_25 = arith.constant 0 : index
    %32 = vector.load %arg3[%c0_22, %c0_23, %c0_24, %c0_25] : memref<1x1x8x16xf32, #tpu.memory_space<vmem>>, vector<1x1x8x16xf32>
    %33 = vector.shape_cast %32 : vector<1x1x8x16xf32> to vector<8x16xf32>
    %cst_26 = arith.constant dense<0.000000e+00> : vector<16x16xf32>
    %34 = tpu.matmul %31, %33, %cst_26 {dimension_numbers = #tpu.dot_dimension_numbers<[1], [0], [0], [1], [0, 0, 1, 1], [], []>} : vector<16x8xf32>, vector<8x16xf32>, vector<16x16xf32> -> vector<16x16xf32>
    %35 = arith.addf %29, %34 : vector<16x16xf32>
    %c0_27 = arith.constant 0 : index
    %c0_28 = arith.constant 0 : index
    %36 = vector.load %arg10[%c0_27, %c0_28] : memref<16x128xf32, #tpu.memory_space<vmem>>, vector<16x16xf32>
    tpu.vector_store %arg10[%c0_27, %c0_28], %35 {strides = array<i32>} : memref<16x128xf32, #tpu.memory_space<vmem>>, vector<16x16xf32>,
    %c0_29 = arith.constant 0 : index
    %c112 = arith.constant 112 : index
    %37 = vector.load %arg10[%c0_29, %c112] : memref<16x128xf32, #tpu.memory_space<vmem>>, vector<16x16xf32>
    %c2_30 = arith.constant 2 : index
    %c0_31 = arith.constant 0 : index
    %c0_32 = arith.constant 0 : index
    %38 = vector.load %arg5[%c2_30, %c0_31, %c0_32] : memref<3x16x8xf32, #tpu.memory_space<vmem>>, vector<1x16x8xf32>
    %39 = vector.shape_cast %38 : vector<1x16x8xf32> to vector<16x8xf32>
    %c0_33 = arith.constant 0 : index
    %c0_34 = arith.constant 0 : index
    %c0_35 = arith.constant 0 : index
    %c0_36 = arith.constant 0 : index
    %40 = vector.load %arg4[%c0_33, %c0_34, %c0_35, %c0_36] : memref<1x1x8x16xf32, #tpu.memory_space<vmem>>, vector<1x1x8x16xf32>
    %41 = vector.shape_cast %40 : vector<1x1x8x16xf32> to vector<8x16xf32>
    %cst_37 = arith.constant dense<0.000000e+00> : vector<16x16xf32>
    %42 = tpu.matmul %39, %41, %cst_37 {dimension_numbers = #tpu.dot_dimension_numbers<[1], [0], [0], [1], [0, 0, 1, 1], [], []>} : vector<16x8xf32>, vector<8x16xf32>, vector<16x16xf32> -> vector<16x16xf32>
    %43 = arith.addf %37, %42 : vector<16x16xf32>
    %c0_38 = arith.constant 0 : index
    %c112_39 = arith.constant 112 : index
    %44 = vector.load %arg10[%c0_38, %c112_39] : memref<16x128xf32, #tpu.memory_space<vmem>>, vector<16x16xf32>
    tpu.vector_store %arg10[%c0_38, %c112_39], %43 {strides = array<i32>} : memref<16x128xf32, #tpu.memory_space<vmem>>, vector<16x16xf32>,
    %c0_40 = arith.constant 0 : index
    %c0_41 = arith.constant 0 : index
    %45 = vector.load %arg10[%c0_40, %c0_41] : memref<16x128xf32, #tpu.memory_space<vmem>>, vector<16x128xf32>
    %c0_42 = arith.constant 0 : index
    %c0_43 = arith.constant 0 : index
    %46 = vector.load %arg6[%c0_42, %c0_43] : memref<16x1xf32, #tpu.memory_space<vmem>>, vector<16x1xf32>
    %47 = vector.broadcast %46 : vector<16x1xf32> to vector<16x128xf32>
    %48 = arith.addf %45, %47 : vector<16x128xf32>
    %cst_44 = arith.constant 0.000000e+00 : f32
    %49 = vector.broadcast %cst_44 : f32 to vector<16x128xf32>
    %50 = arith.maximumf %48, %49 : vector<16x128xf32>
    %c16_i32_45 = arith.constant 16 : i32
    %c0_i32 = arith.constant 0 : i32
    %51 = arith.cmpi eq, %c16_i32_45, %c0_i32 : i32
    %c1_i32 = arith.constant 1 : i32
    %52 = arith.select %51, %c1_i32, %c16_i32_45 : i32
    %53 = vector.broadcast %52 : i32 to vector<1x128xi32>
    %54 = arith.remsi %2, %53 : vector<1x128xi32>
    %c0_i32_46 = arith.constant 0 : i32
    %55 = vector.broadcast %c0_i32_46 : i32 to vector<1x128xi32>
    %56 = arith.cmpi ne, %54, %55 : vector<1x128xi32>
    %c0_i32_47 = arith.constant 0 : i32
    %57 = vector.broadcast %c0_i32_47 : i32 to vector<1x128xi32>
    %58 = arith.cmpi slt, %54, %57 : vector<1x128xi32>
    %c0_i32_48 = arith.constant 0 : i32
    %59 = arith.cmpi slt, %52, %c0_i32_48 : i32
    %60 = vector.broadcast %59 : i1 to vector<1x128xi1>
    %61 = vector.broadcast %60 : vector<1x128xi1> to vector<1x128xi1>
    %62 = arith.xori %58, %61 : vector<1x128xi1>
    %63 = arith.andi %62, %56 : vector<1x128xi1>
    %64 = vector.broadcast %52 : i32 to vector<1x128xi32>
    %65 = arith.addi %54, %64 : vector<1x128xi32>
    %66 = arith.select %63, %65, %54 : vector<1x128xi1>, vector<1x128xi32>
    %c0_i32_49 = arith.constant 0 : i32
    %67 = vector.broadcast %c0_i32_49 : i32 to vector<1x128xi32>
    %68 = arith.cmpi eq, %66, %67 : vector<1x128xi32>
    %c1_i32_50 = arith.constant 1 : i32
    %69 = tpu.dynamic_rotate %50 by %c1_i32_50 dim 1 : vector<16x128xf32>, i32 -> vector<16x128xf32>
    %cst_51 = arith.constant 0.000000e+00 : f32
    %70 = vector.shape_cast %68 : vector<1x128xi1> to vector<1x128xi1>
    %71 = vector.broadcast %70 : vector<1x128xi1> to vector<16x128xi1>
    %72 = vector.broadcast %cst_51 : f32 to vector<16x128xf32>
    %73 = arith.select %71, %72, %69 : vector<16x128xi1>, vector<16x128xf32>
    %c15_i32 = arith.constant 15 : i32
    %74 = vector.broadcast %c15_i32 : i32 to vector<1x128xi32>
    %75 = arith.cmpi eq, %66, %74 : vector<1x128xi32>
    %c127_i32 = arith.constant 127 : i32
    %76 = tpu.dynamic_rotate %50 by %c127_i32 dim 1 : vector<16x128xf32>, i32 -> vector<16x128xf32>
    %cst_52 = arith.constant 0.000000e+00 : f32
    %77 = vector.shape_cast %75 : vector<1x128xi1> to vector<1x128xi1>
    %78 = vector.broadcast %77 : vector<1x128xi1> to vector<16x128xi1>
    %79 = vector.broadcast %cst_52 : f32 to vector<16x128xf32>
    %80 = arith.select %78, %79, %76 : vector<16x128xi1>, vector<16x128xf32>
    %c0_53 = arith.constant 0 : index
    %c0_54 = arith.constant 0 : index
    %c0_55 = arith.constant 0 : index
    %81 = vector.load %arg7[%c0_53, %c0_54, %c0_55] : memref<3x16x16xf32, #tpu.memory_space<vmem>>, vector<1x16x16xf32>
    %82 = vector.shape_cast %81 : vector<1x16x16xf32> to vector<16x16xf32>
    %cst_56 = arith.constant dense<0.000000e+00> : vector<16x128xf32>
    %83 = tpu.matmul %82, %73, %cst_56 {dimension_numbers = #tpu.dot_dimension_numbers<[1], [0], [0], [1], [0, 0, 1, 1], [], []>} : vector<16x16xf32>, vector<16x128xf32>, vector<16x128xf32> -> vector<16x128xf32>
    %c1_57 = arith.constant 1 : index
    %c0_58 = arith.constant 0 : index
    %c0_59 = arith.constant 0 : index
    %84 = vector.load %arg7[%c1_57, %c0_58, %c0_59] : memref<3x16x16xf32, #tpu.memory_space<vmem>>, vector<1x16x16xf32>
    %85 = vector.shape_cast %84 : vector<1x16x16xf32> to vector<16x16xf32>
    %cst_60 = arith.constant dense<0.000000e+00> : vector<16x128xf32>
    %86 = tpu.matmul %85, %50, %cst_60 {dimension_numbers = #tpu.dot_dimension_numbers<[1], [0], [0], [1], [0, 0, 1, 1], [], []>} : vector<16x16xf32>, vector<16x128xf32>, vector<16x128xf32> -> vector<16x128xf32>
    %87 = arith.addf %83, %86 : vector<16x128xf32>
    %c2_61 = arith.constant 2 : index
    %c0_62 = arith.constant 0 : index
    %c0_63 = arith.constant 0 : index
    %88 = vector.load %arg7[%c2_61, %c0_62, %c0_63] : memref<3x16x16xf32, #tpu.memory_space<vmem>>, vector<1x16x16xf32>
    %89 = vector.shape_cast %88 : vector<1x16x16xf32> to vector<16x16xf32>
    %cst_64 = arith.constant dense<0.000000e+00> : vector<16x128xf32>
    %90 = tpu.matmul %89, %80, %cst_64 {dimension_numbers = #tpu.dot_dimension_numbers<[1], [0], [0], [1], [0, 0, 1, 1], [], []>} : vector<16x16xf32>, vector<16x128xf32>, vector<16x128xf32> -> vector<16x128xf32>
    %91 = arith.addf %87, %90 : vector<16x128xf32>
    %c0_65 = arith.constant 0 : index
    %c0_66 = arith.constant 0 : index
    %92 = vector.load %arg8[%c0_65, %c0_66] : memref<16x1xf32, #tpu.memory_space<vmem>>, vector<16x1xf32>
    %93 = vector.broadcast %92 : vector<16x1xf32> to vector<16x128xf32>
    %94 = arith.addf %91, %93 : vector<16x128xf32>
    %cst_67 = arith.constant 0.000000e+00 : f32
    %95 = vector.broadcast %cst_67 : f32 to vector<16x128xf32>
    %96 = arith.maximumf %94, %95 : vector<16x128xf32>
    %c0_68 = arith.constant 0 : index
    %c0_69 = arith.constant 0 : index
    %c0_70 = arith.constant 0 : index
    %97 = vector.load %arg9[%c0_68, %c0_69, %c0_70] : memref<1x16x128xf32, #tpu.memory_space<vmem>>, vector<1x16x128xf32>
    %98 = vector.shape_cast %97 : vector<1x16x128xf32> to vector<16x128xf32>
    %99 = vector.shape_cast %96 : vector<16x128xf32> to vector<1x16x128xf32>
    tpu.vector_store %arg9[%c0_68, %c0_69, %c0_70], %99 {strides = array<i32>} : memref<1x16x128xf32, #tpu.memory_space<vmem>>, vector<1x16x128xf32>,
    return
  }
  func.func @transform_0(%arg0: i32, %arg1: i32) -> (i32, i32, i32) {
    %c0_i32 = arith.constant 0 : i32
    %c0_i32_0 = arith.constant 0 : i32
    return %arg0, %c0_i32, %arg1 : i32, i32, i32
  }
  func.func @transform_1(%arg0: i32, %arg1: i32) -> (i32, i32, i32, i32) {
    %c0_i32 = arith.constant 0 : i32
    %c0_i32_0 = arith.constant 0 : i32
    %c0_i32_1 = arith.constant 0 : i32
    return %arg0, %arg1, %c0_i32, %c0_i32_0 : i32, i32, i32, i32
  }
  func.func @transform_2(%arg0: i32, %arg1: i32) -> (i32, i32, i32, i32) {
    %c0_i32 = arith.constant 0 : i32
    %c0_i32_0 = arith.constant 0 : i32
    %c0_i32_1 = arith.constant 0 : i32
    return %arg0, %arg1, %c0_i32, %c0_i32_0 : i32, i32, i32, i32
  }
  func.func @transform_3(%arg0: i32, %arg1: i32) -> (i32, i32, i32) {
    %c0_i32 = arith.constant 0 : i32
    %c0_i32_0 = arith.constant 0 : i32
    %c0_i32_1 = arith.constant 0 : i32
    %c0_i32_2 = arith.constant 0 : i32
    return %c0_i32, %c0_i32_0, %c0_i32_1 : i32, i32, i32
  }
  func.func @transform_4(%arg0: i32, %arg1: i32) -> (i32, i32) {
    %c0_i32 = arith.constant 0 : i32
    %c0_i32_0 = arith.constant 0 : i32
    %c0_i32_1 = arith.constant 0 : i32
    return %c0_i32, %c0_i32_0 : i32, i32
  }
  func.func @transform_5(%arg0: i32, %arg1: i32) -> (i32, i32, i32) {
    %c0_i32 = arith.constant 0 : i32
    %c0_i32_0 = arith.constant 0 : i32
    %c0_i32_1 = arith.constant 0 : i32
    %c0_i32_2 = arith.constant 0 : i32
    return %c0_i32, %c0_i32_0, %c0_i32_1 : i32, i32, i32
  }
  func.func @transform_6(%arg0: i32, %arg1: i32) -> (i32, i32) {
    %c0_i32 = arith.constant 0 : i32
    %c0_i32_0 = arith.constant 0 : i32
    %c0_i32_1 = arith.constant 0 : i32
    return %c0_i32, %c0_i32_0 : i32, i32
  }
  func.func @transform_7(%arg0: i32, %arg1: i32) -> (i32, i32, i32) {
    %c0_i32 = arith.constant 0 : i32
    %c0_i32_0 = arith.constant 0 : i32
    return %arg0, %c0_i32, %arg1 : i32, i32, i32
  }
}

</mosaic_0001>

<llo_original>
// kernel: tile.13
$region0: #{tile.13}
  #allocation0 [shape = 's32[1]{0}', space=sflag, size = 0x4, scoped, tag = 'scoped memory for tile.13']
  %s0 = inlined_call_operand.vmem [shape: f32[8], index: 0, kind: input, shape index: {}]
  %s1 = inlined_call_operand.vmem [shape: f32[2,8], index: 1, kind: output, shape index: {}]
  // Predicated region
  $region2: #{tile.13} parent=0 // pred_check
    _
  $region3: #{tile.13} parent=0 // pred_check_branch
    %3 = sbr.rel (0) target = $region5
  $region4: #{tile.13} parent=0 // pred_region
    _
  $region5: #{tile.13} parent=0 // pred_fallthru
    _
  %v4 = vld [vmem:[%s0] ss:$0 sm:$0xff]
  %5 = vst [vmem:[%s1] sm:$0x3] %v4

// kernel: tile.0
$region0: #{tile.0}
  %s0 = inlined_call_operand.vmem [shape: f32[2,8], index: 0, kind: input, shape index: {}]
  %s1 = inlined_call_operand.vmem [shape: f32[16,1], index: 1, kind: output, shape index: {}]
  $region1: #{tile.0} parent=0
    #allocation0 [shape = 'u8[4096]{0}', space=vmem, size = 0x1000, scoped, tag = 'scoped mem for input reshape']
    %s3 = sshllo.u32 0, 2
    %v4 = vld [vmem:[%s0] sm:%s3]
    %5 = vst [vmem:[#allocation0] sm:%s3] %v4
    %v6 = vld [vmem:[#allocation0] sm:$0x3]
    %vm7 = vcmask 7168
    %8 = vst.msk [vmem:[%s1] ss:$8 sm:$0x3] %vm7, %v6
    %v9 = vld [vmem:[#allocation0] sm:$0x3]
    %10 = vrot.lane.b32.xlu0 %v9, 127
    %v11 = vpop.permute.xlu0 %10
    %vm12 = vcmask 7168
    %s13 = scalar_lea.vmem %s1, 1
    %14 = vst.msk [vmem:[%s13] ss:$8 sm:$0x3] %vm12, %v11
    %v15 = vld [vmem:[#allocation0] sm:$0x3]
    %16 = vrot.lane.b32.xlu0 %v15, 126
    %v17 = vpop.permute.xlu0 %16
    %vm18 = vcmask 7168
    %s19 = scalar_lea.vmem %s1, 2
    %20 = vst.msk [vmem:[%s19] ss:$8 sm:$0x3] %vm18, %v17
    %v21 = vld [vmem:[#allocation0] sm:$0x3]
    %22 = vrot.lane.b32.xlu0 %v21, 125
    %v23 = vpop.permute.xlu0 %22
    %vm24 = vcmask 7168
    %s25 = scalar_lea.vmem %s1, 3
    %26 = vst.msk [vmem:[%s25] ss:$8 sm:$0x3] %vm24, %v23
    %v27 = vld [vmem:[#allocation0] sm:$0x3]
    %28 = vrot.lane.b32.xlu0 %v27, 124
    %v29 = vpop.permute.xlu0 %28
    %vm30 = vcmask 7168
    %s31 = scalar_lea.vmem %s1, 4
    %32 = vst.msk [vmem:[%s31] ss:$8 sm:$0x3] %vm30, %v29
    %v33 = vld [vmem:[#allocation0] sm:$0x3]
    %34 = vrot.lane.b32.xlu0 %v33, 123
    %v35 = vpop.permute.xlu0 %34
    %vm36 = vcmask 7168
    %s37 = scalar_lea.vmem %s1, 5
    %38 = vst.msk [vmem:[%s37] ss:$8 sm:$0x3] %vm36, %v35
    %v39 = vld [vmem:[#allocation0] sm:$0x3]
    %40 = vrot.lane.b32.xlu0 %v39, 122
    %v41 = vpop.permute.xlu0 %40
    %vm42 = vcmask 7168
    %s43 = scalar_lea.vmem %s1, 6
    %44 = vst.msk [vmem:[%s43] ss:$8 sm:$0x3] %vm42, %v41
    %v45 = vld [vmem:[#allocation0] sm:$0x3]
    %46 = vrot.lane.b32.xlu0 %v45, 121
    %v47 = vpop.permute.xlu0 %46
    %vm48 = vcmask 7168
    %s49 = scalar_lea.vmem %s1, 7
    %50 = vst.msk [vmem:[%s49] ss:$8 sm:$0x3] %vm48, %v47

// kernel: thinconv_pallas.1
$region0: #{thinconv_pallas.1}
  #allocation0 [shape = 'u32[]', space=smem, size = 0x4, offset = 0x4, fixed_abs, tag = 'smem constant byte address 0x4 - core index']
  #allocation1 [shape = 'u32[144,128]{1,0:T(1,128)}', space=vmem, size = 0x12000, scoped, tag = 'internal scratch']
  #allocation2 [shape = 'f32[16,128]{1,0:T(8,128)}', space=vmem, size = 0x2000, scoped, tag = 'scratch operand']
  %s0 = inlined_call_operand.vmem [shape: f32[1,8,256], index: 0, kind: input, shape index: {}]
  %s1 = inlined_call_operand.vmem [shape: f32[1,2,8,16], index: 1, kind: input, shape index: {}]
  %s2 = inlined_call_operand.vmem [shape: f32[1,2,8,16], index: 2, kind: input, shape index: {}]
  %s3 = inlined_call_operand.vmem [shape: f32[3,16,8], index: 3, kind: input, shape index: {}]
  %s4 = inlined_call_operand.vmem [shape: f32[16,1], index: 4, kind: input, shape index: {}]
  %s5 = inlined_call_operand.vmem [shape: f32[3,16,16], index: 5, kind: input, shape index: {}]
  %s6 = inlined_call_operand.vmem [shape: f32[16,1], index: 6, kind: input, shape index: {}]
  %s7 = inlined_call_operand.vmem [shape: f32[1,16,256], index: 7, kind: output, shape index: {}]
  %s8 = sld [smem:[#allocation0]]
  $region95: #{thinconv_pallas.1} parent=0
    _
  %s10 = ssub.s32 1, %s8
  %s11 = scalar_select 0, %s10, %s8
  $region1: #{thinconv_pallas.1} parent=0
    #allocation3 [shape = 'u8[16384]{0}', space=vmem, size = 0x4000, scoped, tag = 'output window, operand 0']
    loop: start=0, step=1, limit=4
    $region2: #{thinconv_pallas.1} parent=1 // loop_pre_header
      _
    $region3: #{thinconv_pallas.1} parent=1 // loop_header
      %s13 = sphi 0, %s17
      %p14 = scmp.ge.s32.totalorder %s13, 4
      %s20 = sphi 0, %s32
      %s21 = sphi 0, %s28
      %s22 = sphi 0, %s20
      %s23 = sphi 0, %s21
      %s24 = sphi 0, %s22
      %s25 = sphi 0, %s23
      %s37 = sphi 0, %s39
      %s40 = sphi 0, %s37
      %s41 = sphi 0, %s40
      %s57 = sphi 0, %s41
      %s65 = sphi 0, %s67
      %s68 = sphi 0, %s65
      %s69 = sphi 0, %s68
      %s85 = sphi 0, %s69
      %s93 = sphi 0, %s95
      %s96 = sphi 0, %s93
      %s97 = sphi 0, %s96
      %s113 = sphi 0, %s97
      %s117 = sphi 0, %s117
      %s119 = sphi 0, %s117
      %s120 = sphi 0, %s119
      %s134 = sphi 0, %s120
      %s138 = sphi 0, %s138
      %s140 = sphi 0, %s138
      %s141 = sphi 0, %s140
      %s155 = sphi 0, %s141
      %s159 = sphi 0, %s159
      %s161 = sphi 0, %s159
      %s162 = sphi 0, %s161
      %s176 = sphi 0, %s162
      %s180 = sphi 0, %s180
      %s182 = sphi 0, %s180
      %s183 = sphi 0, %s182
      %s197 = sphi 0, %s183
      %s205 = sphi 0, %s207
      %s208 = sphi 0, %s205
      %s209 = sphi 0, %s208
      %s225 = sphi 0, %s209
    $region4: #{thinconv_pallas.1} parent=1 // loop_header_branch
      %16 = sbr.rel (%p14) target = $region8
    $region5: #{thinconv_pallas.1} parent=1 // loop_body
      %s18 = ssub.s32 %s13, 1
      %s19 = ssub.s32 %s13, 2
      %s26 = sadd.s32 1, %s21
      %p27 = scmp.ge.s32.totalorder %s26, 2
      %s28 = scalar_select %p27, 0, %s26
      %s29 = sadd.s32 1, %s20
      %s30 = scalar_select %p27, %s29, %s20
      %p31 = scmp.ge.s32.totalorder %s30, 1
      %s32 = scalar_select %p31, 0, %s30
      %s33 = ssub.s32 %s20, %s32
      %s34 = ssub.s32 %s21, %s28
      %s35 = sor.u32 %s33, %s34
      %p36 = scmp.eq.s32.totalorder %s35, 0
      %s38 = sadd.s32 %s37, 1
      %s39 = scalar_select %p36, %s37, %s38
      %p42 = pneg %p36
      %p43 = scmp.eq.s32.totalorder %s13, 1
      %p44 = por %p42, %p43
      %p45 = scmp.ne.s32.totalorder %s37, %s40
      %p46 = scmp.eq.s32.totalorder %s13, 0
      %p47 = por %p45, %p46
      %p48 = scmp.ne.s32.totalorder %s37, %s40
      %p49 = scmp.eq.s32.totalorder %s18, 1
      %p50 = por %p48, %p49
      %p51 = scmp.ne.s32.totalorder %s40, %s41
      %p52 = scmp.eq.s32.totalorder %s18, 0
      %p53 = por %p51, %p52
      %p54 = scmp.ne.s32.totalorder %s40, %s41
      %p55 = scmp.eq.s32.totalorder %s19, 1
      %p56 = por %p54, %p55
      %p58 = scmp.ne.s32.totalorder %s41, %s57
      %p59 = scmp.eq.s32.totalorder %s19, 0
      %p60 = por %p58, %p59
      %s61 = ssub.s32 %s20, %s32
      %s62 = ssub.s32 %s21, %s28
      %s63 = sor.u32 %s61, %s62
      %p64 = scmp.eq.s32.totalorder %s63, 0
      %s66 = sadd.s32 %s65, 1
      %s67 = scalar_select %p64, %s65, %s66
      %p70 = pneg %p64
      %p71 = scmp.eq.s32.totalorder %s13, 1
      %p72 = por %p70, %p71
      %p73 = scmp.ne.s32.totalorder %s65, %s68
      %p74 = scmp.eq.s32.totalorder %s13, 0
      %p75 = por %p73, %p74
      %p76 = scmp.ne.s32.totalorder %s65, %s68
      %p77 = scmp.eq.s32.totalorder %s18, 1
      %p78 = por %p76, %p77
      %p79 = scmp.ne.s32.totalorder %s68, %s69
      %p80 = scmp.eq.s32.totalorder %s18, 0
      %p81 = por %p79, %p80
      %p82 = scmp.ne.s32.totalorder %s68, %s69
      %p83 = scmp.eq.s32.totalorder %s19, 1
      %p84 = por %p82, %p83
      %p86 = scmp.ne.s32.totalorder %s69, %s85
      %p87 = scmp.eq.s32.totalorder %s19, 0
      %p88 = por %p86, %p87
      %s89 = ssub.s32 %s20, %s32
      %s90 = ssub.s32 %s21, %s28
      %s91 = sor.u32 %s89, %s90
      %p92 = scmp.eq.s32.totalorder %s91, 0
      %s94 = sadd.s32 %s93, 1
      %s95 = scalar_select %p92, %s93, %s94
      %p98 = pneg %p92
      %p99 = scmp.eq.s32.totalorder %s13, 1
      %p100 = por %p98, %p99
      %p101 = scmp.ne.s32.totalorder %s93, %s96
      %p102 = scmp.eq.s32.totalorder %s13, 0
      %p103 = por %p101, %p102
      %p104 = scmp.ne.s32.totalorder %s93, %s96
      %p105 = scmp.eq.s32.totalorder %s18, 1
      %p106 = por %p104, %p105
      %p107 = scmp.ne.s32.totalorder %s96, %s97
      %p108 = scmp.eq.s32.totalorder %s18, 0
      %p109 = por %p107, %p108
      %p110 = scmp.ne.s32.totalorder %s96, %s97
      %p111 = scmp.eq.s32.totalorder %s19, 1
      %p112 = por %p110, %p111
      %p114 = scmp.ne.s32.totalorder %s97, %s113
      %p115 = scmp.eq.s32.totalorder %s19, 0
      %p116 = por %p114, %p115
      %s118 = sadd.s32 %s117, 1
      %p121 = scmp.eq.s32.totalorder %s13, 1
      %p122 = scmp.ne.s32.totalorder %s117, %s119
      %p123 = scmp.eq.s32.totalorder %s13, 0
      %p124 = por %p122, %p123
      %p125 = scmp.ne.s32.totalorder %s117, %s119
      %p126 = scmp.eq.s32.totalorder %s18, 1
      %p127 = por %p125, %p126
      %p128 = scmp.ne.s32.totalorder %s119, %s120
      %p129 = scmp.eq.s32.totalorder %s18, 0
      %p130 = por %p128, %p129
      %p131 = scmp.ne.s32.totalorder %s119, %s120
      %p132 = scmp.eq.s32.totalorder %s19, 1
      %p133 = por %p131, %p132
      %p135 = scmp.ne.s32.totalorder %s120, %s134
      %p136 = scmp.eq.s32.totalorder %s19, 0
      %p137 = por %p135, %p136
      %s139 = sadd.s32 %s138, 1
      %p142 = scmp.eq.s32.totalorder %s13, 1
      %p143 = scmp.ne.s32.totalorder %s138, %s140
      %p144 = scmp.eq.s32.totalorder %s13, 0
      %p145 = por %p143, %p144
      %p146 = scmp.ne.s32.totalorder %s138, %s140
      %p147 = scmp.eq.s32.totalorder %s18, 1
      %p148 = por %p146, %p147
      %p149 = scmp.ne.s32.totalorder %s140, %s141
      %p150 = scmp.eq.s32.totalorder %s18, 0
      %p151 = por %p149, %p150
      %p152 = scmp.ne.s32.totalorder %s140, %s141
      %p153 = scmp.eq.s32.totalorder %s19, 1
      %p154 = por %p152, %p153
      %p156 = scmp.ne.s32.totalorder %s141, %s155
      %p157 = scmp.eq.s32.totalorder %s19, 0
      %p158 = por %p156, %p157
      %s160 = sadd.s32 %s159, 1
      %p163 = scmp.eq.s32.totalorder %s13, 1
      %p164 = scmp.ne.s32.totalorder %s159, %s161
      %p165 = scmp.eq.s32.totalorder %s13, 0
      %p166 = por %p164, %p165
      %p167 = scmp.ne.s32.totalorder %s159, %s161
      %p168 = scmp.eq.s32.totalorder %s18, 1
      %p169 = por %p167, %p168
      %p170 = scmp.ne.s32.totalorder %s161, %s162
      %p171 = scmp.eq.s32.totalorder %s18, 0
      %p172 = por %p170, %p171
      %p173 = scmp.ne.s32.totalorder %s161, %s162
      %p174 = scmp.eq.s32.totalorder %s19, 1
      %p175 = por %p173, %p174
      %p177 = scmp.ne.s32.totalorder %s162, %s176
      %p178 = scmp.eq.s32.totalorder %s19, 0
      %p179 = por %p177, %p178
      %s181 = sadd.s32 %s180, 1
      %p184 = scmp.eq.s32.totalorder %s13, 1
      %p185 = scmp.ne.s32.totalorder %s180, %s182
      %p186 = scmp.eq.s32.totalorder %s13, 0
      %p187 = por %p185, %p186
      %p188 = scmp.ne.s32.totalorder %s180, %s182
      %p189 = scmp.eq.s32.totalorder %s18, 1
      %p190 = por %p188, %p189
      %p191 = scmp.ne.s32.totalorder %s182, %s183
      %p192 = scmp.eq.s32.totalorder %s18, 0
      %p193 = por %p191, %p192
      %p194 = scmp.ne.s32.totalorder %s182, %s183
      %p195 = scmp.eq.s32.totalorder %s19, 1
      %p196 = por %p194, %p195
      %p198 = scmp.ne.s32.totalorder %s183, %s197
      %p199 = scmp.eq.s32.totalorder %s19, 0
      %p200 = por %p198, %p199
      %s201 = ssub.s32 %s20, %s32
      %s202 = ssub.s32 %s21, %s28
      %s203 = sor.u32 %s201, %s202
      %p204 = scmp.eq.s32.totalorder %s203, 0
      %s206 = sadd.s32 %s205, 1
      %s207 = scalar_select %p204, %s205, %s206
      %p210 = pneg %p204
      %p211 = scmp.eq.s32.totalorder %s13, 1
      %p212 = por %p210, %p211
      %p213 = scmp.ne.s32.totalorder %s205, %s208
      %p214 = scmp.eq.s32.totalorder %s13, 0
      %p215 = por %p213, %p214
      %p216 = scmp.ne.s32.totalorder %s205, %s208
      %p217 = scmp.eq.s32.totalorder %s18, 1
      %p218 = por %p216, %p217
      %p219 = scmp.ne.s32.totalorder %s208, %s209
      %p220 = scmp.eq.s32.totalorder %s18, 0
      %p221 = por %p219, %p220
      %p222 = scmp.ne.s32.totalorder %s208, %s209
      %p223 = scmp.eq.s32.totalorder %s19, 1
      %p224 = por %p222, %p223
      %p226 = scmp.ne.s32.totalorder %s209, %s225
      %p227 = scmp.eq.s32.totalorder %s19, 0
      %p228 = por %p226, %p227
      %p229 = scmp.le.s32.totalorder 1, %s13
      %p230 = scmp.lt.s32.totalorder %s13, 3
      %p231 = pnand %p229, %p230
      %p232 = pneg %p231
      // Predicated region
      $region9: #{thinconv_pallas.1} parent=5 // pred_check
        _
      $region10: #{thinconv_pallas.1} parent=5 // pred_check_branch
        %234 = sbr.rel (%p231) target = $region12
      $region11: #{thinconv_pallas.1} parent=5 // pred_region
        %s235 = ssub.s32 %s13, 1
        // Predicated region
        $region13: #{thinconv_pallas.1} parent=11 // pred_check
          %p236 = pneg %p130
        $region14: #{thinconv_pallas.1} parent=11 // pred_check_branch
          %238 = sbr.rel (%p236) target = $region16
        $region15: #{thinconv_pallas.1} parent=11 // pred_region
          _
        $region16: #{thinconv_pallas.1} parent=11 // pred_fallthru
          _
        // Predicated region
        $region17: #{thinconv_pallas.1} parent=11 // pred_check
          %p239 = pneg %p151
        $region18: #{thinconv_pallas.1} parent=11 // pred_check_branch
          %241 = sbr.rel (%p239) target = $region20
        $region19: #{thinconv_pallas.1} parent=11 // pred_region
          _
        $region20: #{thinconv_pallas.1} parent=11 // pred_fallthru
          _
        // Predicated region
        $region21: #{thinconv_pallas.1} parent=11 // pred_check
          %p242 = pneg %p172
        $region22: #{thinconv_pallas.1} parent=11 // pred_check_branch
          %244 = sbr.rel (%p242) target = $region24
        $region23: #{thinconv_pallas.1} parent=11 // pred_region
          _
        $region24: #{thinconv_pallas.1} parent=11 // pred_fallthru
          _
        // Predicated region
        $region25: #{thinconv_pallas.1} parent=11 // pred_check
          %p245 = pneg %p193
        $region26: #{thinconv_pallas.1} parent=11 // pred_check_branch
          %247 = sbr.rel (%p245) target = $region28
        $region27: #{thinconv_pallas.1} parent=11 // pred_region
          _
        $region28: #{thinconv_pallas.1} parent=11 // pred_fallthru
          _
      $region12: #{thinconv_pallas.1} parent=5 // pred_fallthru
        _
      %p248 = scmp.lt.s32.totalorder %s13, 2
      // Predicated region
      $region29: #{thinconv_pallas.1} parent=5 // pred_check
        %p249 = pneg %p248
      $region30: #{thinconv_pallas.1} parent=5 // pred_check_branch
        %251 = sbr.rel (%p249) target = $region32
      $region31: #{thinconv_pallas.1} parent=5 // pred_region
        // Predicated region
        $region33: #{thinconv_pallas.1} parent=31 // pred_check
          %p252 = pneg %p47
        $region34: #{thinconv_pallas.1} parent=31 // pred_check_branch
          %254 = sbr.rel (%p252) target = $region36
        $region35: #{thinconv_pallas.1} parent=31 // pred_region
          %p255 = scmp.lt.s32.totalorder %s20, 0
          %s256 = scalar_select %p255, %s20, 0
          %p257 = scmp.lt.s32.totalorder %s21, 1
          %s258 = scalar_select %p257, %s21, 1
          %s259 = smul.addr %s256, 2
          %s260 = sadd.s32 %s258, %s259
          %s261 = smul.addr %s260, 8
          %s262 = scalar_lea.vmem %s0, %s261
        $region36: #{thinconv_pallas.1} parent=31 // pred_fallthru
          _
        // Predicated region
        $region37: #{thinconv_pallas.1} parent=31 // pred_check
          %p263 = pneg %p75
        $region38: #{thinconv_pallas.1} parent=31 // pred_check_branch
          %265 = sbr.rel (%p263) target = $region40
        $region39: #{thinconv_pallas.1} parent=31 // pred_region
          %p266 = scmp.lt.s32.totalorder %s20, 0
          %s267 = scalar_select %p266, %s20, 0
          %p268 = scmp.lt.s32.totalorder %s21, 1
          %s269 = scalar_select %p268, %s21, 1
          %s270 = smul.addr %s267, 2
          %s271 = sadd.s32 %s269, %s270
          %s272 = smul.addr %s271, 8
          %s273 = scalar_lea.vmem %s1, %s272
        $region40: #{thinconv_pallas.1} parent=31 // pred_fallthru
          _
        // Predicated region
        $region41: #{thinconv_pallas.1} parent=31 // pred_check
          %p274 = pneg %p103
        $region42: #{thinconv_pallas.1} parent=31 // pred_check_branch
          %276 = sbr.rel (%p274) target = $region44
        $region43: #{thinconv_pallas.1} parent=31 // pred_region
          %p277 = scmp.lt.s32.totalorder %s20, 0
          %s278 = scalar_select %p277, %s20, 0
          %p279 = scmp.lt.s32.totalorder %s21, 1
          %s280 = scalar_select %p279, %s21, 1
          %s281 = smul.addr %s278, 2
          %s282 = sadd.s32 %s280, %s281
          %s283 = smul.addr %s282, 8
          %s284 = scalar_lea.vmem %s2, %s283
        $region44: #{thinconv_pallas.1} parent=31 // pred_fallthru
          _
      $region32: #{thinconv_pallas.1} parent=5 // pred_fallthru
        _
      %p285 = scmp.le.s32.totalorder 1, %s13
      %p286 = scmp.lt.s32.totalorder %s13, 3
      %p287 = pnand %p285, %p286
      %p288 = pneg %p287
      // Predicated region
      $region45: #{thinconv_pallas.1} parent=5 // pred_check
        _
      $region46: #{thinconv_pallas.1} parent=5 // pred_check_branch
        %290 = sbr.rel (%p287) target = $region48
      $region47: #{thinconv_pallas.1} parent=5 // pred_region
        %s291 = ssub.s32 %s13, 1
        %p292 = scmp.lt.s32.totalorder %s22, 0
        %s293 = scalar_select %p292, %s22, 0
        %p294 = scmp.lt.s32.totalorder %s23, 1
        %s295 = scalar_select %p294, %s23, 1
        %s296 = smul.addr %s293, 2
        %s297 = sadd.s32 %s295, %s296
        %s298 = smul.addr %s297, 8
        %s299 = scalar_lea.vmem %s0, %s298
        %p300 = pneg %p53
        %p301 = pneg %p50
        %p302 = scmp.lt.s32.totalorder %s22, 0
        %s303 = scalar_select %p302, %s22, 0
        %p304 = scmp.lt.s32.totalorder %s23, 1
        %s305 = scalar_select %p304, %s23, 1
        %s306 = smul.addr %s303, 2
        %s307 = sadd.s32 %s305, %s306
        %s308 = smul.addr %s307, 8
        %s309 = scalar_lea.vmem %s1, %s308
        %p310 = pneg %p81
        %p311 = pneg %p78
        %p312 = scmp.lt.s32.totalorder %s22, 0
        %s313 = scalar_select %p312, %s22, 0
        %p314 = scmp.lt.s32.totalorder %s23, 1
        %s315 = scalar_select %p314, %s23, 1
        %s316 = smul.addr %s313, 2
        %s317 = sadd.s32 %s315, %s316
        %s318 = smul.addr %s317, 8
        %s319 = scalar_lea.vmem %s2, %s318
        %p320 = pneg %p109
        %p321 = pneg %p106
        %p322 = pneg %p130
        %p323 = pneg %p127
        %p324 = pneg %p151
        %p325 = pneg %p148
        %p326 = pneg %p172
        %p327 = pneg %p169
        %p328 = pneg %p193
        %p329 = pneg %p190
        %p330 = pneg %p221
        %p331 = pneg %p218
        %s332 = sand.u32 %s208, 1
        %s333 = sand.u32 %s208, 1
        %s334 = smul.addr %s333, 16
        %s335 = scalar_lea.vmem [#allocation3], %s334
        %p336 = scmp.lt.s32.totalorder %s22, 0
        %s337 = scalar_select %p336, %s22, 0
        %p338 = scmp.lt.s32.totalorder %s23, 1
        %s339 = scalar_select %p338, %s23, 1
        %s340 = smul.addr %s337, 2
        %s341 = sadd.s32 %s339, %s340
        %s342 = smul.addr %s341, 8
        %s343 = scalar_lea.vmem %s0, %s342
        %p344 = scmp.lt.s32.totalorder %s22, 0
        %s345 = scalar_select %p344, %s22, 0
        %p346 = scmp.lt.s32.totalorder %s23, 1
        %s347 = scalar_select %p346, %s23, 1
        %s348 = smul.addr %s345, 2
        %s349 = sadd.s32 %s347, %s348
        %s350 = smul.addr %s349, 8
        %s351 = scalar_lea.vmem %s1, %s350
        %p352 = scmp.lt.s32.totalorder %s22, 0
        %s353 = scalar_select %p352, %s22, 0
        %p354 = scmp.lt.s32.totalorder %s23, 1
        %s355 = scalar_select %p354, %s23, 1
        %s356 = smul.addr %s353, 2
        %s357 = sadd.s32 %s355, %s356
        %s358 = smul.addr %s357, 8
        %s359 = scalar_lea.vmem %s2, %s358
        %v360 = vld [vmem:[%s343] sm:$0xff]
        %v361 = vlaneseq
        %v362 = vand.u32 %v361, 127
        %vm363 = vcmp.lt.s32.totalorder %v362, 16
        %364 = vrot.lane.b32.xlu0 %v360, 16
        %v365 = vpop.permute.xlu0 %364
        %v366 = vsel %vm363, 1, 0
        %vm367 = vcmp.eq.s32.totalorder %v366, 1
        %v368 = vsel %vm367, 0.0, %v365
        %vm369 = vcmp.ge.s32.totalorder %v362, 112
        %370 = vrot.lane.b32.xlu0 %v360, 112
        %v371 = vpop.permute.xlu0 %370
        %v372 = vsel %vm369, 1, 0
        %vm373 = vcmp.eq.s32.totalorder %v372, 1
        %v374 = vsel %vm373, 0.0, %v371
        %v375 = vld [vmem:[%s3] sm:$0xff]
        %v376 = vld [vmem:[%s3 + $0x8] sm:$0xff]
        %s377 = scalar_lea.vmem %s3, 16
        %v378 = vld [vmem:[%s377] sm:$0xff]
        %v379 = vld [vmem:[%s377 + $0x8] sm:$0xff]
        %vm380 = vcmask 64512
        %v382 = vsel %vm380, %v378, 0
        %v385 = vsel %vm380, %v379, 0
        %387 = vmatprep.subr.mxu0 0.0
        %388 = vmatpush1.msra.mxu0 %v360
        %389 = vmatprep.subr.mxu0 0.0
        %390 = vmatpush1.msra.mxu0 0.0
        %391 = vmatprep.subr.mxu0 0.0
        %392 = vmatpush1.msra.mxu0 0.0
        %393 = vmatprep.subr.mxu0 0.0
        %394 = vmatpush1.msra.mxu0 0.0
        %395 = vmatprep.subr.mxu0 0.0
        %396 = vmatpush1.msra.mxu0 0.0
        %397 = vmatprep.subr.mxu0 0.0
        %398 = vmatpush1.msra.mxu0 0.0
        %399 = vmatprep.subr.mxu0 0.0
        %400 = vmatpush1.msra.mxu0 0.0
        %401 = vmatprep.subr.mxu0 0.0
        %402 = vmatpush1.msra.mxu0 0.0
        %403 = vmatprep.subr.mxu0 0.0
        %404 = vmatpush1.msra.mxu0 0.0
        %405 = vmatprep.subr.mxu0 0.0
        %406 = vmatpush1.msra.mxu0 0.0
        %407 = vmatprep.subr.mxu0 0.0
        %408 = vmatpush1.msra.mxu0 0.0
        %409 = vmatprep.subr.mxu0 0.0
        %410 = vmatpush1.msra.mxu0 0.0
        %411 = vmatprep.subr.mxu0 0.0
        %412 = vmatpush1.msra.mxu0 0.0
        %413 = vmatprep.subr.mxu0 0.0
        %414 = vmatpush1.msra.mxu0 0.0
        %415 = vmatprep.subr.mxu0 0.0
        %416 = vmatpush1.msra.mxu0 0.0
        %417 = vmatprep.subr.mxu0 0.0
        %418 = vmatpush1.msra.mxu0 0.0
        %419 = vmatprep.subr.mxu0 0.0
        %420 = vmatpush1.msra.mxu0 0.0
        %421 = vmatprep.subr.mxu0 0.0
        %422 = vmatpush1.msra.mxu0 0.0
        %423 = vmatprep.subr.mxu0 0.0
        %424 = vmatpush1.msra.mxu0 0.0
        %425 = vmatprep.subr.mxu0 0.0
        %426 = vmatpush1.msra.mxu0 0.0
        %427 = vmatprep.subr.mxu0 0.0
        %428 = vmatpush1.msra.mxu0 0.0
        %429 = vmatprep.subr.mxu0 0.0
        %430 = vmatpush1.msra.mxu0 0.0
        %431 = vmatprep.subr.mxu0 0.0
        %432 = vmatpush1.msra.mxu0 0.0
        %433 = vmatprep.subr.mxu0 0.0
        %434 = vmatpush1.msra.mxu0 0.0
        %435 = vmatprep.subr.mxu0 0.0
        %436 = vmatpush1.msra.mxu0 0.0
        %437 = vmatprep.subr.mxu0 0.0
        %438 = vmatpush1.msra.mxu0 0.0
        %439 = vmatprep.subr.mxu0 0.0
        %440 = vmatpush1.msra.mxu0 0.0
        %441 = vmatprep.subr.mxu0 0.0
        %442 = vmatpush1.msra.mxu0 0.0
        %443 = vmatprep.subr.mxu0 0.0
        %444 = vmatpush1.msra.mxu0 0.0
        %445 = vmatprep.subr.mxu0 0.0
        %446 = vmatpush1.msra.mxu0 0.0
        %447 = vmatprep.subr.mxu0 0.0
        %448 = vmatpush1.msra.mxu0 0.0
        %449 = vmatprep.subr.mxu0 0.0
        %450 = vmatpush1.msra.mxu0 0.0
        %451 = vmatprep.mubr.f32.mxu0 0.0
        %452 = vmatmul.mubr.f32.gmra.mrb[0].mxu0 %v382
        %v453 = vpop.f32.mrb[0].mxu0
        %v454 = vadd.f32 0.0, %v453
        %v455 = vpop.f32.mrb[0].mxu0
        %456 = vmatprep.mubr.f32.mxu0 0.0
        %457 = vmatmul.mubr.f32.gmra.mrb[0].mxu0 %v385
        %v458 = vpop.f32.mrb[0].mxu0
        %v459 = vadd.f32 0.0, %v458
        %v460 = vpop.f32.mrb[0].mxu0
        %461 = vdwg.mxu0
        %v463 = vsel %vm380, %v375, 0
        %v466 = vsel %vm380, %v376, 0
        %468 = vmatprep.subr.mxu0 0.0
        %469 = vmatpush1.msra.mxu0 %v368
        %470 = vmatprep.subr.mxu0 0.0
        %471 = vmatpush1.msra.mxu0 0.0
        %472 = vmatprep.subr.mxu0 0.0
        %473 = vmatpush1.msra.mxu0 0.0
        %474 = vmatprep.subr.mxu0 0.0
        %475 = vmatpush1.msra.mxu0 0.0
        %476 = vmatprep.subr.mxu0 0.0
        %477 = vmatpush1.msra.mxu0 0.0
        %478 = vmatprep.subr.mxu0 0.0
        %479 = vmatpush1.msra.mxu0 0.0
        %480 = vmatprep.subr.mxu0 0.0
        %481 = vmatpush1.msra.mxu0 0.0
        %482 = vmatprep.subr.mxu0 0.0
        %483 = vmatpush1.msra.mxu0 0.0
        %484 = vmatprep.subr.mxu0 0.0
        %485 = vmatpush1.msra.mxu0 0.0
        %486 = vmatprep.subr.mxu0 0.0
        %487 = vmatpush1.msra.mxu0 0.0
        %488 = vmatprep.subr.mxu0 0.0
        %489 = vmatpush1.msra.mxu0 0.0
        %490 = vmatprep.subr.mxu0 0.0
        %491 = vmatpush1.msra.mxu0 0.0
        %492 = vmatprep.subr.mxu0 0.0
        %493 = vmatpush1.msra.mxu0 0.0
        %494 = vmatprep.subr.mxu0 0.0
        %495 = vmatpush1.msra.mxu0 0.0
        %496 = vmatprep.subr.mxu0 0.0
        %497 = vmatpush1.msra.mxu0 0.0
        %498 = vmatprep.subr.mxu0 0.0
        %499 = vmatpush1.msra.mxu0 0.0
        %500 = vmatprep.subr.mxu0 0.0
        %501 = vmatpush1.msra.mxu0 0.0
        %502 = vmatprep.subr.mxu0 0.0
        %503 = vmatpush1.msra.mxu0 0.0
        %504 = vmatprep.subr.mxu0 0.0
        %505 = vmatpush1.msra.mxu0 0.0
        %506 = vmatprep.subr.mxu0 0.0
        %507 = vmatpush1.msra.mxu0 0.0
        %508 = vmatprep.subr.mxu0 0.0
        %509 = vmatpush1.msra.mxu0 0.0
        %510 = vmatprep.subr.mxu0 0.0
        %511 = vmatpush1.msra.mxu0 0.0
        %512 = vmatprep.subr.mxu0 0.0
        %513 = vmatpush1.msra.mxu0 0.0
        %514 = vmatprep.subr.mxu0 0.0
        %515 = vmatpush1.msra.mxu0 0.0
        %516 = vmatprep.subr.mxu0 0.0
        %517 = vmatpush1.msra.mxu0 0.0
        %518 = vmatprep.subr.mxu0 0.0
        %519 = vmatpush1.msra.mxu0 0.0
        %520 = vmatprep.subr.mxu0 0.0
        %521 = vmatpush1.msra.mxu0 0.0
        %522 = vmatprep.subr.mxu0 0.0
        %523 = vmatpush1.msra.mxu0 0.0
        %524 = vmatprep.subr.mxu0 0.0
        %525 = vmatpush1.msra.mxu0 0.0
        %526 = vmatprep.subr.mxu0 0.0
        %527 = vmatpush1.msra.mxu0 0.0
        %528 = vmatprep.subr.mxu0 0.0
        %529 = vmatpush1.msra.mxu0 0.0
        %530 = vmatprep.subr.mxu0 0.0
        %531 = vmatpush1.msra.mxu0 0.0
        %532 = vmatprep.mubr.f32.mxu0 0.0
        %533 = vmatmul.mubr.f32.gmra.mrb[0].mxu0 %v463
        %v534 = vpop.f32.mrb[0].mxu0
        %v535 = vadd.f32 %v454, %v534
        %v536 = vpop.f32.mrb[0].mxu0
        %537 = vmatprep.mubr.f32.mxu0 0.0
        %538 = vmatmul.mubr.f32.gmra.mrb[0].mxu0 %v466
        %v539 = vpop.f32.mrb[0].mxu0
        %v540 = vadd.f32 %v459, %v539
        %v541 = vpop.f32.mrb[0].mxu0
        %542 = vdwg.mxu0
        %s543 = scalar_lea.vmem %s3, 32
        %v544 = vld [vmem:[%s543] sm:$0xff]
        %v545 = vld [vmem:[%s543 + $0x8] sm:$0xff]
        %v547 = vsel %vm380, %v544, 0
        %v550 = vsel %vm380, %v545, 0
        %552 = vmatprep.subr.mxu0 0.0
        %553 = vmatpush1.msra.mxu0 %v374
        %554 = vmatprep.subr.mxu0 0.0
        %555 = vmatpush1.msra.mxu0 0.0
        %556 = vmatprep.subr.mxu0 0.0
        %557 = vmatpush1.msra.mxu0 0.0
        %558 = vmatprep.subr.mxu0 0.0
        %559 = vmatpush1.msra.mxu0 0.0
        %560 = vmatprep.subr.mxu0 0.0
        %561 = vmatpush1.msra.mxu0 0.0
        %562 = vmatprep.subr.mxu0 0.0
        %563 = vmatpush1.msra.mxu0 0.0
        %564 = vmatprep.subr.mxu0 0.0
        %565 = vmatpush1.msra.mxu0 0.0
        %566 = vmatprep.subr.mxu0 0.0
        %567 = vmatpush1.msra.mxu0 0.0
        %568 = vmatprep.subr.mxu0 0.0
        %569 = vmatpush1.msra.mxu0 0.0
        %570 = vmatprep.subr.mxu0 0.0
        %571 = vmatpush1.msra.mxu0 0.0
        %572 = vmatprep.subr.mxu0 0.0
        %573 = vmatpush1.msra.mxu0 0.0
        %574 = vmatprep.subr.mxu0 0.0
        %575 = vmatpush1.msra.mxu0 0.0
        %576 = vmatprep.subr.mxu0 0.0
        %577 = vmatpush1.msra.mxu0 0.0
        %578 = vmatprep.subr.mxu0 0.0
        %579 = vmatpush1.msra.mxu0 0.0
        %580 = vmatprep.subr.mxu0 0.0
        %581 = vmatpush1.msra.mxu0 0.0
        %582 = vmatprep.subr.mxu0 0.0
        %583 = vmatpush1.msra.mxu0 0.0
        %584 = vmatprep.subr.mxu0 0.0
        %585 = vmatpush1.msra.mxu0 0.0
        %586 = vmatprep.subr.mxu0 0.0
        %587 = vmatpush1.msra.mxu0 0.0
        %588 = vmatprep.subr.mxu0 0.0
        %589 = vmatpush1.msra.mxu0 0.0
        %590 = vmatprep.subr.mxu0 0.0
        %591 = vmatpush1.msra.mxu0 0.0
        %592 = vmatprep.subr.mxu0 0.0
        %593 = vmatpush1.msra.mxu0 0.0
        %594 = vmatprep.subr.mxu0 0.0
        %595 = vmatpush1.msra.mxu0 0.0
        %596 = vmatprep.subr.mxu0 0.0
        %597 = vmatpush1.msra.mxu0 0.0
        %598 = vmatprep.subr.mxu0 0.0
        %599 = vmatpush1.msra.mxu0 0.0
        %600 = vmatprep.subr.mxu0 0.0
        %601 = vmatpush1.msra.mxu0 0.0
        %602 = vmatprep.subr.mxu0 0.0
        %603 = vmatpush1.msra.mxu0 0.0
        %604 = vmatprep.subr.mxu0 0.0
        %605 = vmatpush1.msra.mxu0 0.0
        %606 = vmatprep.subr.mxu0 0.0
        %607 = vmatpush1.msra.mxu0 0.0
        %608 = vmatprep.subr.mxu0 0.0
        %609 = vmatpush1.msra.mxu0 0.0
        %610 = vmatprep.subr.mxu0 0.0
        %611 = vmatpush1.msra.mxu0 0.0
        %612 = vmatprep.subr.mxu0 0.0
        %613 = vmatpush1.msra.mxu0 0.0
        %614 = vmatprep.subr.mxu0 0.0
        %615 = vmatpush1.msra.mxu0 0.0
        %616 = vmatprep.mubr.f32.mxu0 0.0
        %617 = vmatmul.mubr.f32.gmra.mrb[0].mxu0 %v547
        %v618 = vpop.f32.mrb[0].mxu0
        %v619 = vadd.f32 0.0, %v618
        %v620 = vpop.f32.mrb[0].mxu0
        %621 = vmatprep.mubr.f32.mxu0 0.0
        %622 = vmatmul.mubr.f32.gmra.mrb[0].mxu0 %v550
        %v623 = vpop.f32.mrb[0].mxu0
        %v624 = vadd.f32 0.0, %v623
        %v625 = vpop.f32.mrb[0].mxu0
        %626 = vdwg.mxu0
        %v627 = vadd.f32 %v535, %v619
        %v628 = vadd.f32 %v540, %v624
        %629 = vst [vmem:[#allocation2] sm:$0xff] %v627
        %630 = vst [vmem:[#allocation2 + $0x8] sm:$0xff] %v628
        %v631 = vld [vmem:[#allocation2] sm:$0xff]
        %v632 = vld [vmem:[#allocation2 + $0x8] sm:$0xff]
        %v633 = vld [vmem:[%s3] sm:$0xff]
        %v634 = vld [vmem:[%s3 + $0x8] sm:$0xff]
        %v635 = vld [vmem:[%s351] sm:$0xff]
        %v637 = vsel %vm380, %v633, 0
        %v640 = vsel %vm380, %v634, 0
        %642 = vmatprep.subr.mxu0 0.0
        %643 = vmatpush1.msra.mxu0 %v635
        %644 = vmatprep.subr.mxu0 0.0
        %645 = vmatpush1.msra.mxu0 0.0
        %646 = vmatprep.subr.mxu0 0.0
        %647 = vmatpush1.msra.mxu0 0.0
        %648 = vmatprep.subr.mxu0 0.0
        %649 = vmatpush1.msra.mxu0 0.0
        %650 = vmatprep.subr.mxu0 0.0
        %651 = vmatpush1.msra.mxu0 0.0
        %652 = vmatprep.subr.mxu0 0.0
        %653 = vmatpush1.msra.mxu0 0.0
        %654 = vmatprep.subr.mxu0 0.0
        %655 = vmatpush1.msra.mxu0 0.0
        %656 = vmatprep.subr.mxu0 0.0
        %657 = vmatpush1.msra.mxu0 0.0
        %658 = vmatprep.subr.mxu0 0.0
        %659 = vmatpush1.msra.mxu0 0.0
        %660 = vmatprep.subr.mxu0 0.0
        %661 = vmatpush1.msra.mxu0 0.0
        %662 = vmatprep.subr.mxu0 0.0
        %663 = vmatpush1.msra.mxu0 0.0
        %664 = vmatprep.subr.mxu0 0.0
        %665 = vmatpush1.msra.mxu0 0.0
        %666 = vmatprep.subr.mxu0 0.0
        %667 = vmatpush1.msra.mxu0 0.0
        %668 = vmatprep.subr.mxu0 0.0
        %669 = vmatpush1.msra.mxu0 0.0
        %670 = vmatprep.subr.mxu0 0.0
        %671 = vmatpush1.msra.mxu0 0.0
        %672 = vmatprep.subr.mxu0 0.0
        %673 = vmatpush1.msra.mxu0 0.0
        %674 = vmatprep.subr.mxu0 0.0
        %675 = vmatpush1.msra.mxu0 0.0
        %676 = vmatprep.subr.mxu0 0.0
        %677 = vmatpush1.msra.mxu0 0.0
        %678 = vmatprep.subr.mxu0 0.0
        %679 = vmatpush1.msra.mxu0 0.0
        %680 = vmatprep.subr.mxu0 0.0
        %681 = vmatpush1.msra.mxu0 0.0
        %682 = vmatprep.subr.mxu0 0.0
        %683 = vmatpush1.msra.mxu0 0.0
        %684 = vmatprep.subr.mxu0 0.0
        %685 = vmatpush1.msra.mxu0 0.0
        %686 = vmatprep.subr.mxu0 0.0
        %687 = vmatpush1.msra.mxu0 0.0
        %688 = vmatprep.subr.mxu0 0.0
        %689 = vmatpush1.msra.mxu0 0.0
        %690 = vmatprep.subr.mxu0 0.0
        %691 = vmatpush1.msra.mxu0 0.0
        %692 = vmatprep.subr.mxu0 0.0
        %693 = vmatpush1.msra.mxu0 0.0
        %694 = vmatprep.subr.mxu0 0.0
        %695 = vmatpush1.msra.mxu0 0.0
        %696 = vmatprep.subr.mxu0 0.0
        %697 = vmatpush1.msra.mxu0 0.0
        %698 = vmatprep.subr.mxu0 0.0
        %699 = vmatpush1.msra.mxu0 0.0
        %700 = vmatprep.subr.mxu0 0.0
        %701 = vmatpush1.msra.mxu0 0.0
        %702 = vmatprep.subr.mxu0 0.0
        %703 = vmatpush1.msra.mxu0 0.0
        %704 = vmatprep.subr.mxu0 0.0
        %705 = vmatpush1.msra.mxu0 0.0
        %706 = vmatprep.mubr.f32.mxu0 0.0
        %707 = vmatmul.mubr.f32.gmra.mrb[0].mxu0 %v637
        %v708 = vpop.f32.mrb[0].mxu0
        %v709 = vadd.f32 0.0, %v708
        %v710 = vpop.f32.mrb[0].mxu0
        %711 = vmatprep.mubr.f32.mxu0 0.0
        %712 = vmatmul.mubr.f32.gmra.mrb[0].mxu0 %v640
        %v713 = vpop.f32.mrb[0].mxu0
        %v714 = vadd.f32 0.0, %v713
        %v715 = vpop.f32.mrb[0].mxu0
        %716 = vdwg.mxu0
        %v717 = vadd.f32 %v631, %v709
        %v718 = vadd.f32 %v632, %v714
        %vm719 = vcmask 130048
        %720 = vst.msk [vmem:[#allocation2] sm:$0xff] %vm719, %v717
        %721 = vst.msk [vmem:[#allocation2 + $0x8] sm:$0xff] %vm719, %v718
        %v722 = vld [vmem:[#allocation2] sm:$0xff]
        %v723 = vld [vmem:[#allocation2 + $0x8] sm:$0xff]
        %v724 = vld [vmem:[%s543] sm:$0xff]
        %v725 = vld [vmem:[%s543 + $0x8] sm:$0xff]
        %v726 = vld [vmem:[%s359] sm:$0xff]
        %v728 = vsel %vm380, %v724, 0
        %v731 = vsel %vm380, %v725, 0
        %733 = vmatprep.subr.mxu0 0.0
        %734 = vmatpush1.msra.mxu0 %v726
        %735 = vmatprep.subr.mxu0 0.0
        %736 = vmatpush1.msra.mxu0 0.0
        %737 = vmatprep.subr.mxu0 0.0
        %738 = vmatpush1.msra.mxu0 0.0
        %739 = vmatprep.subr.mxu0 0.0
        %740 = vmatpush1.msra.mxu0 0.0
        %741 = vmatprep.subr.mxu0 0.0
        %742 = vmatpush1.msra.mxu0 0.0
        %743 = vmatprep.subr.mxu0 0.0
        %744 = vmatpush1.msra.mxu0 0.0
        %745 = vmatprep.subr.mxu0 0.0
        %746 = vmatpush1.msra.mxu0 0.0
        %747 = vmatprep.subr.mxu0 0.0
        %748 = vmatpush1.msra.mxu0 0.0
        %749 = vmatprep.subr.mxu0 0.0
        %750 = vmatpush1.msra.mxu0 0.0
        %751 = vmatprep.subr.mxu0 0.0
        %752 = vmatpush1.msra.mxu0 0.0
        %753 = vmatprep.subr.mxu0 0.0
        %754 = vmatpush1.msra.mxu0 0.0
        %755 = vmatprep.subr.mxu0 0.0
        %756 = vmatpush1.msra.mxu0 0.0
        %757 = vmatprep.subr.mxu0 0.0
        %758 = vmatpush1.msra.mxu0 0.0
        %759 = vmatprep.subr.mxu0 0.0
        %760 = vmatpush1.msra.mxu0 0.0
        %761 = vmatprep.subr.mxu0 0.0
        %762 = vmatpush1.msra.mxu0 0.0
        %763 = vmatprep.subr.mxu0 0.0
        %764 = vmatpush1.msra.mxu0 0.0
        %765 = vmatprep.subr.mxu0 0.0
        %766 = vmatpush1.msra.mxu0 0.0
        %767 = vmatprep.subr.mxu0 0.0
        %768 = vmatpush1.msra.mxu0 0.0
        %769 = vmatprep.subr.mxu0 0.0
        %770 = vmatpush1.msra.mxu0 0.0
        %771 = vmatprep.subr.mxu0 0.0
        %772 = vmatpush1.msra.mxu0 0.0
        %773 = vmatprep.subr.mxu0 0.0
        %774 = vmatpush1.msra.mxu0 0.0
        %775 = vmatprep.subr.mxu0 0.0
        %776 = vmatpush1.msra.mxu0 0.0
        %777 = vmatprep.subr.mxu0 0.0
        %778 = vmatpush1.msra.mxu0 0.0
        %779 = vmatprep.subr.mxu0 0.0
        %780 = vmatpush1.msra.mxu0 0.0
        %781 = vmatprep.subr.mxu0 0.0
        %782 = vmatpush1.msra.mxu0 0.0
        %783 = vmatprep.subr.mxu0 0.0
        %784 = vmatpush1.msra.mxu0 0.0
        %785 = vmatprep.subr.mxu0 0.0
        %786 = vmatpush1.msra.mxu0 0.0
        %787 = vmatprep.subr.mxu0 0.0
        %788 = vmatpush1.msra.mxu0 0.0
        %789 = vmatprep.subr.mxu0 0.0
        %790 = vmatpush1.msra.mxu0 0.0
        %791 = vmatprep.subr.mxu0 0.0
        %792 = vmatpush1.msra.mxu0 0.0
        %793 = vmatprep.subr.mxu0 0.0
        %794 = vmatpush1.msra.mxu0 0.0
        %795 = vmatprep.subr.mxu0 0.0
        %796 = vmatpush1.msra.mxu0 0.0
        %797 = vmatprep.mubr.f32.mxu0 0.0
        %798 = vmatmul.mubr.f32.gmra.mrb[0].mxu0 %v728
        %v799 = vpop.f32.mrb[0].mxu0
        %v800 = vadd.f32 0.0, %v799
        %v801 = vpop.f32.mrb[0].mxu0
        %802 = vmatprep.mubr.f32.mxu0 0.0
        %803 = vmatmul.mubr.f32.gmra.mrb[0].mxu0 %v731
        %v804 = vpop.f32.mrb[0].mxu0
        %v805 = vadd.f32 0.0, %v804
        %v806 = vpop.f32.mrb[0].mxu0
        %807 = vdwg.mxu0
        %810 = vrot.lane.b32.xlu0 %v800, 112
        %v811 = vpop.permute.xlu0 %810
        %812 = vrot.lane.b32.xlu0 %v805, 112
        %v813 = vpop.permute.xlu0 %812
        %v816 = vadd.f32 %v722, %v811
        %v817 = vadd.f32 %v723, %v813
        %vm818 = vcmask 1048448
        %819 = vst.msk [vmem:[#allocation2] sm:$0xff] %vm818, %v816
        %820 = vst.msk [vmem:[#allocation2 + $0x8] sm:$0xff] %vm818, %v817
        %v821 = vld [vmem:[#allocation2] sm:$0xff]
        %v822 = vld [vmem:[#allocation2 + $0x8] sm:$0xff]
        %v823 = vld [vmem:[%s4] sm:$0xff]
        %v824 = vld [vmem:[%s4 + $0x8] sm:$0xff]
        %826 = vset.pattern.permute.xlu0 0
        %827 = vperm.xlu0 %826, %v823
        %v828 = vpop.permute.xlu0 %827
        %831 = vset.pattern.permute.xlu0 0
        %832 = vperm.xlu0 %831, %v824
        %v833 = vpop.permute.xlu0 %832
        %v835 = vadd.f32 %v821, %v828
        %v836 = vadd.f32 %v822, %v833
        %v837 = vmax.f32 %v835, 0.0
        %v838 = vmax.f32 %v836, 0.0
        %vm839 = vcmp.lt.s32.totalorder %v362, 0
        %v840 = vsub.s32 0, %v362
        %v841 = vsel %vm839, %v840, %v362
        %v842 = vshrl.u32 %v841, 4
        %v843 = vand.u32 %v841, 15
        %v844 = vsub.s32 0, %v843
        %v845 = vsel %vm839, %v844, %v843
        %vm846 = vcmp.ne.s32.totalorder %v845, 0
        %vm847 = vcmp.lt.s32.totalorder %v845, 0
        %vm848 = vmand %vm847, %vm846
        %v849 = vadd.s32 %v845, 16
        %v850 = vsel %vm848, %v849, %v845
        %vm851 = vcmp.eq.s32.totalorder %v850, 0
        %852 = vrot.lane.b32.xlu0 %v837, 1
        %v853 = vpop.permute.xlu0 %852
        %854 = vrot.lane.b32.xlu0 %v838, 1
        %v855 = vpop.permute.xlu0 %854
        %v856 = vsel %vm851, 1, 0
        %vm857 = vcmp.eq.s32.totalorder %v856, 1
        %v858 = vsel %vm857, 0.0, %v853
        %v859 = vsel %vm857, 0.0, %v855
        %vm860 = vcmp.eq.s32.totalorder %v850, 15
        %861 = vrot.lane.b32.xlu0 %v837, 127
        %v862 = vpop.permute.xlu0 %861
        %863 = vrot.lane.b32.xlu0 %v838, 127
        %v864 = vpop.permute.xlu0 %863
        %v865 = vsel %vm860, 1, 0
        %vm866 = vcmp.eq.s32.totalorder %v865, 1
        %v867 = vsel %vm866, 0.0, %v862
        %v868 = vsel %vm866, 0.0, %v864
        %v869 = vld [vmem:[%s5] sm:$0xff]
        %v870 = vld [vmem:[%s5 + $0x8] sm:$0xff]
        %s871 = scalar_lea.vmem %s5, 16
        %v872 = vld [vmem:[%s871] sm:$0xff]
        %v873 = vld [vmem:[%s871 + $0x8] sm:$0xff]
        %v875 = vsel %vm719, %v872, 0
        %v878 = vsel %vm719, %v873, 0
        %880 = vmatprep.subr.mxu0 0.0
        %881 = vmatpush1.msra.mxu0 %v837
        %882 = vmatprep.subr.mxu0 0.0
        %883 = vmatpush1.msra.mxu0 %v838
        %884 = vmatprep.subr.mxu0 0.0
        %885 = vmatpush1.msra.mxu0 0.0
        %886 = vmatprep.subr.mxu0 0.0
        %887 = vmatpush1.msra.mxu0 0.0
        %888 = vmatprep.subr.mxu0 0.0
        %889 = vmatpush1.msra.mxu0 0.0
        %890 = vmatprep.subr.mxu0 0.0
        %891 = vmatpush1.msra.mxu0 0.0
        %892 = vmatprep.subr.mxu0 0.0
        %893 = vmatpush1.msra.mxu0 0.0
        %894 = vmatprep.subr.mxu0 0.0
        %895 = vmatpush1.msra.mxu0 0.0
        %896 = vmatprep.subr.mxu0 0.0
        %897 = vmatpush1.msra.mxu0 0.0
        %898 = vmatprep.subr.mxu0 0.0
        %899 = vmatpush1.msra.mxu0 0.0
        %900 = vmatprep.subr.mxu0 0.0
        %901 = vmatpush1.msra.mxu0 0.0
        %902 = vmatprep.subr.mxu0 0.0
        %903 = vmatpush1.msra.mxu0 0.0
        %904 = vmatprep.subr.mxu0 0.0
        %905 = vmatpush1.msra.mxu0 0.0
        %906 = vmatprep.subr.mxu0 0.0
        %907 = vmatpush1.msra.mxu0 0.0
        %908 = vmatprep.subr.mxu0 0.0
        %909 = vmatpush1.msra.mxu0 0.0
        %910 = vmatprep.subr.mxu0 0.0
        %911 = vmatpush1.msra.mxu0 0.0
        %912 = vmatprep.subr.mxu0 0.0
        %913 = vmatpush1.msra.mxu0 0.0
        %914 = vmatprep.subr.mxu0 0.0
        %915 = vmatpush1.msra.mxu0 0.0
        %916 = vmatprep.subr.mxu0 0.0
        %917 = vmatpush1.msra.mxu0 0.0
        %918 = vmatprep.subr.mxu0 0.0
        %919 = vmatpush1.msra.mxu0 0.0
        %920 = vmatprep.subr.mxu0 0.0
        %921 = vmatpush1.msra.mxu0 0.0
        %922 = vmatprep.subr.mxu0 0.0
        %923 = vmatpush1.msra.mxu0 0.0
        %924 = vmatprep.subr.mxu0 0.0
        %925 = vmatpush1.msra.mxu0 0.0
        %926 = vmatprep.subr.mxu0 0.0
        %927 = vmatpush1.msra.mxu0 0.0
        %928 = vmatprep.subr.mxu0 0.0
        %929 = vmatpush1.msra.mxu0 0.0
        %930 = vmatprep.subr.mxu0 0.0
        %931 = vmatpush1.msra.mxu0 0.0
        %932 = vmatprep.subr.mxu0 0.0
        %933 = vmatpush1.msra.mxu0 0.0
        %934 = vmatprep.subr.mxu0 0.0
        %935 = vmatpush1.msra.mxu0 0.0
        %936 = vmatprep.subr.mxu0 0.0
        %937 = vmatpush1.msra.mxu0 0.0
        %938 = vmatprep.subr.mxu0 0.0
        %939 = vmatpush1.msra.mxu0 0.0
        %940 = vmatprep.subr.mxu0 0.0
        %941 = vmatpush1.msra.mxu0 0.0
        %942 = vmatprep.subr.mxu0 0.0
        %943 = vmatpush1.msra.mxu0 0.0
        %944 = vmatprep.mubr.f32.mxu0 0.0
        %945 = vmatmul.mubr.f32.gmra.mrb[0].mxu0 %v875
        %v946 = vpop.f32.mrb[0].mxu0
        %v947 = vadd.f32 0.0, %v946
        %v948 = vpop.f32.mrb[0].mxu0
        %949 = vmatprep.mubr.f32.mxu0 0.0
        %950 = vmatmul.mubr.f32.gmra.mrb[0].mxu0 %v878
        %v951 = vpop.f32.mrb[0].mxu0
        %v952 = vadd.f32 0.0, %v951
        %v953 = vpop.f32.mrb[0].mxu0
        %954 = vdwg.mxu0
        %v956 = vsel %vm719, %v869, 0
        %v959 = vsel %vm719, %v870, 0
        %961 = vmatprep.subr.mxu0 0.0
        %962 = vmatpush1.msra.mxu0 %v858
        %963 = vmatprep.subr.mxu0 0.0
        %964 = vmatpush1.msra.mxu0 %v859
        %965 = vmatprep.subr.mxu0 0.0
        %966 = vmatpush1.msra.mxu0 0.0
        %967 = vmatprep.subr.mxu0 0.0
        %968 = vmatpush1.msra.mxu0 0.0
        %969 = vmatprep.subr.mxu0 0.0
        %970 = vmatpush1.msra.mxu0 0.0
        %971 = vmatprep.subr.mxu0 0.0
        %972 = vmatpush1.msra.mxu0 0.0
        %973 = vmatprep.subr.mxu0 0.0
        %974 = vmatpush1.msra.mxu0 0.0
        %975 = vmatprep.subr.mxu0 0.0
        %976 = vmatpush1.msra.mxu0 0.0
        %977 = vmatprep.subr.mxu0 0.0
        %978 = vmatpush1.msra.mxu0 0.0
        %979 = vmatprep.subr.mxu0 0.0
        %980 = vmatpush1.msra.mxu0 0.0
        %981 = vmatprep.subr.mxu0 0.0
        %982 = vmatpush1.msra.mxu0 0.0
        %983 = vmatprep.subr.mxu0 0.0
        %984 = vmatpush1.msra.mxu0 0.0
        %985 = vmatprep.subr.mxu0 0.0
        %986 = vmatpush1.msra.mxu0 0.0
        %987 = vmatprep.subr.mxu0 0.0
        %988 = vmatpush1.msra.mxu0 0.0
        %989 = vmatprep.subr.mxu0 0.0
        %990 = vmatpush1.msra.mxu0 0.0
        %991 = vmatprep.subr.mxu0 0.0
        %992 = vmatpush1.msra.mxu0 0.0
        %993 = vmatprep.subr.mxu0 0.0
        %994 = vmatpush1.msra.mxu0 0.0
        %995 = vmatprep.subr.mxu0 0.0
        %996 = vmatpush1.msra.mxu0 0.0
        %997 = vmatprep.subr.mxu0 0.0
        %998 = vmatpush1.msra.mxu0 0.0
        %999 = vmatprep.subr.mxu0 0.0
        %1000 = vmatpush1.msra.mxu0 0.0
        %1001 = vmatprep.subr.mxu0 0.0
        %1002 = vmatpush1.msra.mxu0 0.0
        %1003 = vmatprep.subr.mxu0 0.0
        %1004 = vmatpush1.msra.mxu0 0.0
        %1005 = vmatprep.subr.mxu0 0.0
        %1006 = vmatpush1.msra.mxu0 0.0
        %1007 = vmatprep.subr.mxu0 0.0
        %1008 = vmatpush1.msra.mxu0 0.0
        %1009 = vmatprep.subr.mxu0 0.0
        %1010 = vmatpush1.msra.mxu0 0.0
        %1011 = vmatprep.subr.mxu0 0.0
        %1012 = vmatpush1.msra.mxu0 0.0
        %1013 = vmatprep.subr.mxu0 0.0
        %1014 = vmatpush1.msra.mxu0 0.0
        %1015 = vmatprep.subr.mxu0 0.0
        %1016 = vmatpush1.msra.mxu0 0.0
        %1017 = vmatprep.subr.mxu0 0.0
        %1018 = vmatpush1.msra.mxu0 0.0
        %1019 = vmatprep.subr.mxu0 0.0
        %1020 = vmatpush1.msra.mxu0 0.0
        %1021 = vmatprep.subr.mxu0 0.0
        %1022 = vmatpush1.msra.mxu0 0.0
        %1023 = vmatprep.subr.mxu0 0.0
        %1024 = vmatpush1.msra.mxu0 0.0
        %1025 = vmatprep.mubr.f32.mxu0 0.0
        %1026 = vmatmul.mubr.f32.gmra.mrb[0].mxu0 %v956
        %v1027 = vpop.f32.mrb[0].mxu0
        %v1028 = vadd.f32 %v947, %v1027
        %v1029 = vpop.f32.mrb[0].mxu0
        %1030 = vmatprep.mubr.f32.mxu0 0.0
        %1031 = vmatmul.mubr.f32.gmra.mrb[0].mxu0 %v959
        %v1032 = vpop.f32.mrb[0].mxu0
        %v1033 = vadd.f32 %v952, %v1032
        %v1034 = vpop.f32.mrb[0].mxu0
        %1035 = vdwg.mxu0
        %s1036 = scalar_lea.vmem %s5, 32
        %v1037 = vld [vmem:[%s1036] sm:$0xff]
        %v1038 = vld [vmem:[%s1036 + $0x8] sm:$0xff]
        %v1040 = vsel %vm719, %v1037, 0
        %v1043 = vsel %vm719, %v1038, 0
        %1045 = vmatprep.subr.mxu0 0.0
        %1046 = vmatpush1.msra.mxu0 %v867
        %1047 = vmatprep.subr.mxu0 0.0
        %1048 = vmatpush1.msra.mxu0 %v868
        %1049 = vmatprep.subr.mxu0 0.0
        %1050 = vmatpush1.msra.mxu0 0.0
        %1051 = vmatprep.subr.mxu0 0.0
        %1052 = vmatpush1.msra.mxu0 0.0
        %1053 = vmatprep.subr.mxu0 0.0
        %1054 = vmatpush1.msra.mxu0 0.0
        %1055 = vmatprep.subr.mxu0 0.0
        %1056 = vmatpush1.msra.mxu0 0.0
        %1057 = vmatprep.subr.mxu0 0.0
        %1058 = vmatpush1.msra.mxu0 0.0
        %1059 = vmatprep.subr.mxu0 0.0
        %1060 = vmatpush1.msra.mxu0 0.0
        %1061 = vmatprep.subr.mxu0 0.0
        %1062 = vmatpush1.msra.mxu0 0.0
        %1063 = vmatprep.subr.mxu0 0.0
        %1064 = vmatpush1.msra.mxu0 0.0
        %1065 = vmatprep.subr.mxu0 0.0
        %1066 = vmatpush1.msra.mxu0 0.0
        %1067 = vmatprep.subr.mxu0 0.0
        %1068 = vmatpush1.msra.mxu0 0.0
        %1069 = vmatprep.subr.mxu0 0.0
        %1070 = vmatpush1.msra.mxu0 0.0
        %1071 = vmatprep.subr.mxu0 0.0
        %1072 = vmatpush1.msra.mxu0 0.0
        %1073 = vmatprep.subr.mxu0 0.0
        %1074 = vmatpush1.msra.mxu0 0.0
        %1075 = vmatprep.subr.mxu0 0.0
        %1076 = vmatpush1.msra.mxu0 0.0
        %1077 = vmatprep.subr.mxu0 0.0
        %1078 = vmatpush1.msra.mxu0 0.0
        %1079 = vmatprep.subr.mxu0 0.0
        %1080 = vmatpush1.msra.mxu0 0.0
        %1081 = vmatprep.subr.mxu0 0.0
        %1082 = vmatpush1.msra.mxu0 0.0
        %1083 = vmatprep.subr.mxu0 0.0
        %1084 = vmatpush1.msra.mxu0 0.0
        %1085 = vmatprep.subr.mxu0 0.0
        %1086 = vmatpush1.msra.mxu0 0.0
        %1087 = vmatprep.subr.mxu0 0.0
        %1088 = vmatpush1.msra.mxu0 0.0
        %1089 = vmatprep.subr.mxu0 0.0
        %1090 = vmatpush1.msra.mxu0 0.0
        %1091 = vmatprep.subr.mxu0 0.0
        %1092 = vmatpush1.msra.mxu0 0.0
        %1093 = vmatprep.subr.mxu0 0.0
        %1094 = vmatpush1.msra.mxu0 0.0
        %1095 = vmatprep.subr.mxu0 0.0
        %1096 = vmatpush1.msra.mxu0 0.0
        %1097 = vmatprep.subr.mxu0 0.0
        %1098 = vmatpush1.msra.mxu0 0.0
        %1099 = vmatprep.subr.mxu0 0.0
        %1100 = vmatpush1.msra.mxu0 0.0
        %1101 = vmatprep.subr.mxu0 0.0
        %1102 = vmatpush1.msra.mxu0 0.0
        %1103 = vmatprep.subr.mxu0 0.0
        %1104 = vmatpush1.msra.mxu0 0.0
        %1105 = vmatprep.subr.mxu0 0.0
        %1106 = vmatpush1.msra.mxu0 0.0
        %1107 = vmatprep.subr.mxu0 0.0
        %1108 = vmatpush1.msra.mxu0 0.0
        %1109 = vmatprep.mubr.f32.mxu0 0.0
        %1110 = vmatmul.mubr.f32.gmra.mrb[0].mxu0 %v1040
        %v1111 = vpop.f32.mrb[0].mxu0
        %v1112 = vadd.f32 0.0, %v1111
        %v1113 = vpop.f32.mrb[0].mxu0
        %1114 = vmatprep.mubr.f32.mxu0 0.0
        %1115 = vmatmul.mubr.f32.gmra.mrb[0].mxu0 %v1043
        %v1116 = vpop.f32.mrb[0].mxu0
        %v1117 = vadd.f32 0.0, %v1116
        %v1118 = vpop.f32.mrb[0].mxu0
        %1119 = vdwg.mxu0
        %v1120 = vadd.f32 %v1028, %v1112
        %v1121 = vadd.f32 %v1033, %v1117
        %v1122 = vld [vmem:[%s6] sm:$0xff]
        %v1123 = vld [vmem:[%s6 + $0x8] sm:$0xff]
        %1125 = vset.pattern.permute.xlu0 0
        %1126 = vperm.xlu0 %1125, %v1122
        %v1127 = vpop.permute.xlu0 %1126
        %1130 = vset.pattern.permute.xlu0 0
        %1131 = vperm.xlu0 %1130, %v1123
        %v1132 = vpop.permute.xlu0 %1131
        %v1134 = vadd.f32 %v1120, %v1127
        %v1135 = vadd.f32 %v1121, %v1132
        %v1136 = vmax.f32 %v1134, 0.0
        %v1137 = vmax.f32 %v1135, 0.0
        %1138 = vst [vmem:[%s335] sm:$0xff] %v1136
        %1139 = vst [vmem:[%s335 + $0x8] sm:$0xff] %v1137
        %s1140 = sand.u32 %s208, 1
        %s1141 = sand.u32 %s208, 1
        %s1142 = smul.addr %s1141, 16
        %s1143 = scalar_lea.vmem [#allocation3], %s1142
        // Predicated region
        $region49: #{thinconv_pallas.1} parent=47 // pred_check
          %p1144 = pneg %p218
        $region50: #{thinconv_pallas.1} parent=47 // pred_check_branch
          %1146 = sbr.rel (%p1144) target = $region52
        $region51: #{thinconv_pallas.1} parent=47 // pred_region
          %s1147 = smul.addr %s22, 4
          %s1148 = sadd.s32 %s23, %s1147
          %s1149 = smul.addr %s1148, 8
          %s1150 = scalar_lea.vmem %s7, %s1149
          // Predicated region
          $region53: #{thinconv_pallas.1} parent=51 // pred_check
            _
          $region54: #{thinconv_pallas.1} parent=51 // pred_check_branch
            %1152 = sbr.rel (0) target = $region56
          $region55: #{thinconv_pallas.1} parent=51 // pred_region
            // Predicated region
            $region57: #{thinconv_pallas.1} parent=55 // pred_check
              _
            $region58: #{thinconv_pallas.1} parent=55 // pred_check_branch
              %1154 = sbr.rel (0) target = $region60
            $region59: #{thinconv_pallas.1} parent=55 // pred_region
              // Predicated region
              $region72: #{thinconv_pallas.1} parent=59 // pred_check
                _
              $region73: #{thinconv_pallas.1} parent=59 // pred_check_branch
                %1171 = sbr.rel (0) target = $region75
              $region74: #{thinconv_pallas.1} parent=59 // pred_region
                loop: start=0, step=1, limit=1
                $region76: #{thinconv_pallas.1} parent=74 // loop_pre_header
                  _
                $region77: #{thinconv_pallas.1} parent=74 // loop_header
                  %s1173 = sphi 0, %s1177
                  %p1174 = scmp.ge.s32.totalorder %s1173, 1
                  %s1178 = sphi %s1143, %s1143
                  %s1179 = sphi %s1150, %s1150
                $region78: #{thinconv_pallas.1} parent=74 // loop_header_branch
                  %1176 = sbr.rel (%p1174) target = $region82
                $region79: #{thinconv_pallas.1} parent=74 // loop_body
                  %v1180 = vld [vmem:[%s1178] sm:$0xff]
                  %1181 = vst [vmem:[%s1179] sm:$0xff] %v1180
                  %v1182 = vld [vmem:[%s1178 + $0x8] sm:$0xff]
                  %1183 = vst [vmem:[%s1179 + $0x10] sm:$0xff] %v1182
                $region80: #{thinconv_pallas.1} parent=74 // loop_footer
                  %s1177 = sadd.s32 1, %s1173
                $region81: #{thinconv_pallas.1} parent=74 // loop_footer_branch
                  %1172 = sbr.rel target = $region77
                $region82: #{thinconv_pallas.1} parent=74 // loop_exit
                  _
              $region75: #{thinconv_pallas.1} parent=59 // pred_fallthru
                _
              // Predicated region
              $region83: #{thinconv_pallas.1} parent=59 // pred_check
                _
              $region84: #{thinconv_pallas.1} parent=59 // pred_check_branch
                %1185 = sbr.rel target = $region86
              $region85: #{thinconv_pallas.1} parent=59 // pred_region
                _
              $region86: #{thinconv_pallas.1} parent=59 // pred_fallthru
                _
            $region60: #{thinconv_pallas.1} parent=55 // pred_fallthru
              _
            // Predicated region
            $region61: #{thinconv_pallas.1} parent=55 // pred_check
              _
            $region62: #{thinconv_pallas.1} parent=55 // pred_check_branch
              %1156 = sbr.rel target = $region64
            $region63: #{thinconv_pallas.1} parent=55 // pred_region
              loop: start=0, step=1, limit=1
              $region65: #{thinconv_pallas.1} parent=63 // loop_pre_header
                _
              $region66: #{thinconv_pallas.1} parent=63 // loop_header
                %s1159 = sphi 0, %s1163
                %p1160 = scmp.ge.s32.totalorder %s1159, 1
                %s1164 = sphi %s1143, %s1143
                %s1165 = sphi %s1150, %s1150
              $region67: #{thinconv_pallas.1} parent=63 // loop_header_branch
                %1162 = sbr.rel (%p1160) target = $region71
              $region68: #{thinconv_pallas.1} parent=63 // loop_body
                %v1166 = vld [vmem:[%s1164] sm:$0xff]
                %1167 = vst [vmem:[%s1165] sm:$0xff] %v1166
                %v1168 = vld [vmem:[%s1164 + $0x8] sm:$0xff]
                %1169 = vst [vmem:[%s1165 + $0x10] sm:$0xff] %v1168
              $region69: #{thinconv_pallas.1} parent=63 // loop_footer
                %s1163 = sadd.s32 1, %s1159
              $region70: #{thinconv_pallas.1} parent=63 // loop_footer_branch
                %1158 = sbr.rel target = $region66
              $region71: #{thinconv_pallas.1} parent=63 // loop_exit
                _
            $region64: #{thinconv_pallas.1} parent=55 // pred_fallthru
              _
          $region56: #{thinconv_pallas.1} parent=51 // pred_fallthru
            _
          %1186 = vnop
        $region52: #{thinconv_pallas.1} parent=47 // pred_fallthru
          _
      $region48: #{thinconv_pallas.1} parent=5 // pred_fallthru
        _
      %p1187 = scmp.le.s32.totalorder 2, %s13
      // Predicated region
      $region87: #{thinconv_pallas.1} parent=5 // pred_check
        %p1188 = pneg %p1187
      $region88: #{thinconv_pallas.1} parent=5 // pred_check_branch
        %1190 = sbr.rel (%p1188) target = $region90
      $region89: #{thinconv_pallas.1} parent=5 // pred_region
        %s1191 = ssub.s32 %s13, 2
        // Predicated region
        $region91: #{thinconv_pallas.1} parent=89 // pred_check
          %p1192 = pneg %p224
        $region92: #{thinconv_pallas.1} parent=89 // pred_check_branch
          %1194 = sbr.rel (%p1192) target = $region94
        $region93: #{thinconv_pallas.1} parent=89 // pred_region
          %s1195 = sand.u32 %s209, 1
          %s1196 = sand.u32 %s209, 1
          %s1197 = smul.addr %s1196, 16
          %s1198 = scalar_lea.vmem [#allocation3], %s1197
        $region94: #{thinconv_pallas.1} parent=89 // pred_fallthru
          _
      $region90: #{thinconv_pallas.1} parent=5 // pred_fallthru
        _
    $region6: #{thinconv_pallas.1} parent=1 // loop_footer
      %s17 = sadd.s32 1, %s13
    $region7: #{thinconv_pallas.1} parent=1 // loop_footer_branch
      %12 = sbr.rel target = $region3
    $region8: #{thinconv_pallas.1} parent=1 // loop_exit
      _

</llo_original>
